<compile_context>
chip_gen: v7x
topology: tpu7x:2x2x1
jax: 0.10.0
libtpu: 0.0.40
codegen_flags: <defaults>
</compile_context>

<pallas_src>
import math

import jax
import jax.numpy as jnp
import numpy as np
from jax.experimental import pallas as pl
from jax.experimental.pallas import tpu as pltpu


def _round_up(x, m):
    return (x + m - 1) // m * m


def _vmem_limit(block_bytes):
    """Scoped-VMEM limit with headroom, capped at 3/4 of physical VMEM.

    v5e/v6e have 128 MiB physical VMEM, v7x only 64 MiB; deriving the cap from the
    hardware keeps the larger tiles from hitting a wall on v7x.
    """
    try:
        info = pltpu.get_tpu_info()
        cap = int(getattr(info, "vmem_capacity_bytes", 64 * 1024 * 1024))
    except Exception:  # pragma: no cover - conservative fallback (v7x-safe)
        cap = 64 * 1024 * 1024
    ceiling = (cap * 3) // 4
    return int(min(ceiling, max(16 * 1024 * 1024, 2 * block_bytes)))


# ---------------------------------------------------------------------------
# Adjacency preparation: bf16 cast + padding + compacted nonzero-block indices.
# Cache the returned dict if the adjacency is reused across layers / steps.
# ---------------------------------------------------------------------------
def prepare_adjacency(adjacency, *, tile_n=512, tile_k=512):
    n = adjacency.shape[0]
    assert adjacency.shape == (n, n)

    # Clamp tiles for small graphs, keeping sublane/lane alignment
    # (tile_n % 8 == 0, tile_k % 128 == 0).
    tile_n = int(min(tile_n, _round_up(n, 256)))
    tile_k = int(min(tile_k, _round_up(n, 256)))
    # Keep >= 2 row tiles where possible so the "parallel" row axis can shard
    # across the two v7x TensorCores (megacore).
    while _round_up(n, tile_n) // tile_n < 2 and tile_n > 256:
        tile_n //= 2
    n_pad = _round_up(n, math.lcm(tile_n, tile_k))

    # Single N^2 pass: cast to bf16 first, then pad (no separate f32 pad pass).
    adj_bf = jnp.pad(adjacency.astype(jnp.bfloat16),
                     ((0, n_pad - n), (0, n_pad - n)))

    # One block-reduction pass over the bf16 copy -> tiny [n_ib, n_kb] bool map.
    n_ib, n_kb = n_pad // tile_n, n_pad // tile_k
    nnz = np.asarray(jax.device_get(
        (adj_bf != 0).reshape(n_ib, tile_n, n_kb, tile_k).any(axis=(1, 3))))

    # Compact nonzero k-block indices per row tile (host side, tiny arrays).
    counts = nnz.sum(axis=1).astype(np.int32)
    max_nnz = max(int(counts.max()) if counts.size else 0, 1)
    kidx = np.zeros((n_ib, max_nnz), np.int32)
    for i in range(n_ib):
        nz = np.nonzero(nnz[i])[0].astype(np.int32)
        if nz.size:
            kidx[i, :nz.size] = nz
            # Masked tail steps repeat the last valid index -> no new DMA issued.
            kidx[i, nz.size:] = nz[-1]

    return dict(adj_bf=adj_bf,
                counts=jnp.asarray(counts),
                kidx=jnp.asarray(kidx.reshape(-1)),   # flattened 1D for SMEM
                max_nnz=max_nnz,
                n=n, n_pad=n_pad, tile_n=tile_n, tile_k=tile_k)


# ---------------------------------------------------------------------------
# Fused kernel: out[i] = sum_{k in nonzero(i)} A[i,k] @ (X[k] @ W)  + bias
# ---------------------------------------------------------------------------
def _gcn_fused_kernel(cnt_ref, kidx_ref, adj_ref, x_ref, w_ref, b_ref,
                      out_ref, acc_ref):
    del kidx_ref  # only used inside the index_maps
    i = pl.program_id(0)
    kk = pl.program_id(1)

    @pl.when(kk == 0)
    def _():
        acc_ref[...] = jnp.zeros_like(acc_ref)

    # Only the first counts[i] steps of this row tile carry real (nonzero) blocks;
    # the tail repeats the last block index (no DMA) and is masked off here.
    @pl.when(kk < cnt_ref[i])
    def _():
        # support k-tile recomputed in-kernel from the X k-tile (W is resident);
        # cast to bf16 so both MXU matmuls run at bf16 rate with f32 accumulation.
        sup = jnp.dot(x_ref[...], w_ref[...],
                      preferred_element_type=jnp.float32).astype(jnp.bfloat16)
        acc_ref[...] += jnp.dot(adj_ref[...], sup,
                                preferred_element_type=jnp.float32)

    @pl.when(kk == pl.num_programs(1) - 1)
    def _():
        out_ref[...] = (acc_ref[...] + b_ref[...]).astype(out_ref.dtype)


def _gcn_fused(counts, kidx_flat, max_nnz, adj_bf, x_bf, w_bf, b2d, out_dtype,
               *, tile_n, tile_k):
    n_pad = adj_bf.shape[0]
    f_in_pad = x_bf.shape[1]
    f_out_pad = w_bf.shape[1]
    n_ib = n_pad // tile_n
    out_isz = np.dtype(out_dtype).itemsize

    blk_bytes = (
        2 * tile_n * tile_k * 2            # adjacency tiles (bf16, double-buffered)
        + 2 * tile_k * f_in_pad * 2        # X tiles (bf16, double-buffered)
        + 2 * f_in_pad * f_out_pad * 2     # resident W (counted twice, conservative)
        + 2 * f_out_pad * 4                # bias
        + tile_n * f_out_pad * 4           # f32 accumulator scratch
        + 2 * tile_n * f_out_pad * out_isz # output tiles
    )

    # Data-dependent index maps: zero adjacency blocks are never fetched.
    adj_map = lambda i, kk, cnt, kidx: (i, kidx[i * max_nnz + kk])
    x_map = lambda i, kk, cnt, kidx: (kidx[i * max_nnz + kk], 0)

    return pl.pallas_call(
        _gcn_fused_kernel,
        out_shape=jax.ShapeDtypeStruct((n_pad, f_out_pad), out_dtype),
        grid_spec=pltpu.PrefetchScalarGridSpec(
            num_scalar_prefetch=2,  # counts, kidx -> SMEM, passed to every index_map
            grid=(n_ib, max_nnz),
            in_specs=[
                pl.BlockSpec((tile_n, tile_k), adj_map),
                pl.BlockSpec((tile_k, f_in_pad), x_map),
                pl.BlockSpec((f_in_pad, f_out_pad),
                             lambda i, kk, cnt, kidx: (0, 0)),  # W resident
                pl.BlockSpec((1, f_out_pad),
                             lambda i, kk, cnt, kidx: (0, 0)),  # bias resident
            ],
            out_specs=pl.BlockSpec((tile_n, f_out_pad),
                                   lambda i, kk, cnt, kidx: (i, 0)),
            scratch_shapes=[pltpu.VMEM((tile_n, f_out_pad), jnp.float32)],
        ),
        compiler_params=pltpu.CompilerParams(
            # Row-tile axis is independent -> parallel (megacore sharding);
            # the contraction axis carries the accumulator -> arbitrary (and last).
            dimension_semantics=("parallel", "arbitrary"),
            vmem_limit_bytes=_vmem_limit(blk_bytes),
        ),
    )(counts, kidx_flat, adj_bf, x_bf, w_bf, b2d)


# ---------------------------------------------------------------------------
# Wrapper: full GCN layer forward
# ---------------------------------------------------------------------------
def graph_convolution(adjacency, input_feature, weight, bias=None, *,
                      tile_n=512, tile_k=512, out_dtype=None):
    """GCN forward: adjacency @ (input_feature @ weight) + bias.

    `adjacency` may be either the dense [N, N] matrix or the dict returned by
    prepare_adjacency() (to amortise the bf16 cast / block-map build across layers).
    """
    n, f_in = input_feature.shape
    f_out = weight.shape[1]
    assert weight.shape[0] == f_in
    out_dtype = input_feature.dtype if out_dtype is None else out_dtype

    if isinstance(adjacency, dict):
        prep = adjacency
        assert prep["n"] == n
    else:
        assert adjacency.shape == (n, n)
        prep = prepare_adjacency(adjacency, tile_n=tile_n, tile_k=tile_k)

    n_pad = prep["n_pad"]
    f_in_pad = _round_up(f_in, 128)
    f_out_pad = _round_up(f_out, 128)

    x_bf = jnp.pad(input_feature.astype(jnp.bfloat16),
                   ((0, n_pad - n), (0, f_in_pad - f_in)))
    w_bf = jnp.pad(weight.astype(jnp.bfloat16),
                   ((0, f_in_pad - f_in), (0, f_out_pad - f_out)))
    if bias is None:
        bias = jnp.zeros((f_out,), jnp.float32)
    b2d = jnp.pad(bias.astype(jnp.float32),
                  (0, f_out_pad - f_out)).reshape(1, f_out_pad)

    out = _gcn_fused(prep["counts"], prep["kidx"], prep["max_nnz"],
                     prep["adj_bf"], x_bf, w_bf, b2d, out_dtype,
                     tile_n=prep["tile_n"], tile_k=prep["tile_k"])
    return out[:n, :f_out]


def init_params(key, input_dim, output_dim, use_bias=True):
    """Deterministic re-implementation of the module's reset_parameters()."""
    # kaiming_uniform_ (a=0): bound = sqrt(2) * sqrt(3 / fan_in); for an
    # (input_dim, output_dim) tensor PyTorch uses fan_in = output_dim.
    bound = math.sqrt(2.0) * math.sqrt(3.0 / output_dim)
    weight = jax.random.uniform(key, (input_dim, output_dim), jnp.float32,
                                minval=-bound, maxval=bound)
    bias = jnp.zeros((output_dim,), jnp.float32) if use_bias else None
    return weight, bias


if __name__ == "__main__":
    key = jax.random.PRNGKey(0)
    k_adj, k_feat, k_w, k_b = jax.random.split(key, 4)

    n_nodes = 2048     # number of graph nodes (4x4 grid of 512-blocks)
    input_dim = 60     # node input feature dim (tests feature-dim padding)
    output_dim = 100   # output feature dim     (tests output-dim padding)

    # Node features.
    x = jax.random.normal(k_feat, (n_nodes, input_dim), jnp.float32)

    # Synthetic sparse, symmetrically-normalized adjacency.  Band-limited so that
    # with 512x512 tiles several blocks are entirely zero (exercises the
    # DMA-skipping index_map) and per-row-tile nonzero counts differ (exercises
    # the pl.when tail masking).
    raw = jax.random.uniform(k_adj, (n_nodes, n_nodes), jnp.float32)
    idx = jnp.arange(n_nodes)
    band = jnp.abs(idx[:, None] - idx[None, :]) < 80
    mask = ((raw > 0.9) & band).astype(jnp.float32)
    adj = jnp.maximum(mask, mask.T) + jnp.eye(n_nodes, dtype=jnp.float32)   # A + I
    deg = jnp.sum(adj, axis=1)
    d_inv_sqrt = 1.0 / jnp.sqrt(deg)
    adjacency = adj * d_inv_sqrt[:, None] * d_inv_sqrt[None, :]

    weight, _ = init_params(k_w, input_dim, output_dim, use_bias=True)
    # The module inits bias to zeros; use a nonzero bias so the add is exercised.
    bias = 0.1 * jax.random.normal(k_b, (output_dim,), jnp.float32)

    out = graph_convolution(adjacency, x, weight, bias)
    out = jax.block_until_ready(out)

    # Reference emulating the kernel's bf16-input / f32-accumulate path
    # (intentional bf16 tolerance; see header comment).
    adj_r = np.asarray(adjacency.astype(jnp.bfloat16).astype(jnp.float32))
    x_r = np.asarray(x.astype(jnp.bfloat16).astype(jnp.float32))
    w_r = np.asarray(weight.astype(jnp.bfloat16).astype(jnp.float32))
    sup_r = np.asarray(jnp.asarray(x_r @ w_r).astype(jnp.bfloat16).astype(jnp.float32))
    ref = adj_r @ sup_r + np.asarray(bias)[None, :]

    np.testing.assert_allclose(np.asarray(out), ref, rtol=1e-2, atol=1e-2)
    print("KERNEL_OK")
</pallas_src>

<mosaic_0001>
module attributes {stable_mosaic.version = 11 : i64} {
  func.func @_gcn_fused_kernel(%arg0: i32, %arg1: i32, %arg2: memref<4xi32, #tpu.memory_space<smem>>, %arg3: memref<12xi32, #tpu.memory_space<smem>>, %arg4: memref<512x512xbf16, #tpu.memory_space<vmem>>, %arg5: memref<512x128xbf16, #tpu.memory_space<vmem>>, %arg6: memref<128x128xbf16, #tpu.memory_space<vmem>>, %arg7: memref<1x128xf32, #tpu.memory_space<vmem>>, %arg8: memref<512x128xf32, #tpu.memory_space<vmem>>, %arg9: memref<512x128xf32, #tpu.memory_space<vmem>>) attributes {dimension_semantics = [#tpu.dimension_semantics<parallel>, #tpu.dimension_semantics<arbitrary>], iteration_bounds = array<i64: 4, 3>, scalar_prefetch = 2 : i64, scratch_operands = 1 : i64, tpu.core_type = #tpu.core_type<tc>, window_params = [{transform_indices = @transform_0, window_bounds = array<i64: 512, 512>}, {transform_indices = @transform_1, window_bounds = array<i64: 512, 128>}, {pipeline_mode = #tpu.pipeline_mode<synchronous>, transform_indices = @transform_2, window_bounds = array<i64: 128, 128>}, {pipeline_mode = #tpu.pipeline_mode<synchronous>, transform_indices = @transform_3, window_bounds = array<i64: 1, 128>}, {transform_indices = @transform_4, window_bounds = array<i64: 512, 128>}]} {
    %c0_i32 = arith.constant 0 : i32
    %0 = arith.cmpi eq, %arg1, %c0_i32 : i32
    %1 = arith.extui %0 : i1 to i32
    %c0_i32_0 = arith.constant 0 : i32
    %2 = arith.cmpi ne, %1, %c0_i32_0 : i32
    scf.if %2 {
      %cst = arith.constant 0.000000e+00 : f32
      %11 = vector.broadcast %cst : f32 to vector<512x128xf32>
      %c0 = arith.constant 0 : index
      %c0_3 = arith.constant 0 : index
      %12 = vector.load %arg9[%c0, %c0_3] : memref<512x128xf32, #tpu.memory_space<vmem>>, vector<512x128xf32>
      tpu.vector_store %arg9[%c0, %c0_3], %11 {strides = array<i32>} : memref<512x128xf32, #tpu.memory_space<vmem>>, vector<512x128xf32>,
    } else {
    }
    %3 = arith.index_cast %arg0 : i32 to index
    %4 = memref.load %arg2[%3] : memref<4xi32, #tpu.memory_space<smem>>
    %5 = arith.cmpi slt, %arg1, %4 : i32
    %6 = arith.extui %5 : i1 to i32
    %c0_i32_1 = arith.constant 0 : i32
    %7 = arith.cmpi ne, %6, %c0_i32_1 : i32
    scf.if %7 {
      %c0 = arith.constant 0 : index
      %c0_3 = arith.constant 0 : index
      %11 = vector.load %arg5[%c0, %c0_3] : memref<512x128xbf16, #tpu.memory_space<vmem>>, vector<512x128xbf16>
      %c0_4 = arith.constant 0 : index
      %c0_5 = arith.constant 0 : index
      %12 = vector.load %arg6[%c0_4, %c0_5] : memref<128x128xbf16, #tpu.memory_space<vmem>>, vector<128x128xbf16>
      %cst = arith.constant dense<0.000000e+00> : vector<512x128xf32>
      %13 = tpu.matmul %11, %12, %cst {dimension_numbers = #tpu.dot_dimension_numbers<[1], [0], [0], [1], [0, 0, 1, 1], [], []>} : vector<512x128xbf16>, vector<128x128xbf16>, vector<512x128xf32> -> vector<512x128xf32>
      %14 = arith.truncf %13 : vector<512x128xf32> to vector<512x128xbf16>
      %c0_6 = arith.constant 0 : index
      %c0_7 = arith.constant 0 : index
      %15 = vector.load %arg9[%c0_6, %c0_7] : memref<512x128xf32, #tpu.memory_space<vmem>>, vector<512x128xf32>
      %c0_8 = arith.constant 0 : index
      %c0_9 = arith.constant 0 : index
      %16 = vector.load %arg4[%c0_8, %c0_9] : memref<512x512xbf16, #tpu.memory_space<vmem>>, vector<512x512xbf16>
      %cst_10 = arith.constant dense<0.000000e+00> : vector<512x128xf32>
      %17 = tpu.matmul %16, %14, %cst_10 {dimension_numbers = #tpu.dot_dimension_numbers<[1], [0], [0], [1], [0, 0, 1, 1], [], []>} : vector<512x512xbf16>, vector<512x128xbf16>, vector<512x128xf32> -> vector<512x128xf32>
      %18 = arith.addf %15, %17 : vector<512x128xf32>
      %c0_11 = arith.constant 0 : index
      %c0_12 = arith.constant 0 : index
      %19 = vector.load %arg9[%c0_11, %c0_12] : memref<512x128xf32, #tpu.memory_space<vmem>>, vector<512x128xf32>
      tpu.vector_store %arg9[%c0_11, %c0_12], %18 {strides = array<i32>} : memref<512x128xf32, #tpu.memory_space<vmem>>, vector<512x128xf32>,
    } else {
    }
    %c2_i32 = arith.constant 2 : i32
    %8 = arith.cmpi eq, %arg1, %c2_i32 : i32
    %9 = arith.extui %8 : i1 to i32
    %c0_i32_2 = arith.constant 0 : i32
    %10 = arith.cmpi ne, %9, %c0_i32_2 : i32
    scf.if %10 {
      %c0 = arith.constant 0 : index
      %c0_3 = arith.constant 0 : index
      %11 = vector.load %arg9[%c0, %c0_3] : memref<512x128xf32, #tpu.memory_space<vmem>>, vector<512x128xf32>
      %c0_4 = arith.constant 0 : index
      %c0_5 = arith.constant 0 : index
      %12 = vector.load %arg7[%c0_4, %c0_5] : memref<1x128xf32, #tpu.memory_space<vmem>>, vector<1x128xf32>
      %13 = vector.broadcast %12 : vector<1x128xf32> to vector<512x128xf32>
      %14 = arith.addf %11, %13 : vector<512x128xf32>
      %c0_6 = arith.constant 0 : index
      %c0_7 = arith.constant 0 : index
      %15 = vector.load %arg8[%c0_6, %c0_7] : memref<512x128xf32, #tpu.memory_space<vmem>>, vector<512x128xf32>
      tpu.vector_store %arg8[%c0_6, %c0_7], %14 {strides = array<i32>} : memref<512x128xf32, #tpu.memory_space<vmem>>, vector<512x128xf32>,
    } else {
    }
    return
  }
  func.func @transform_0(%arg0: i32, %arg1: i32, %arg2: memref<4xi32, #tpu.memory_space<smem>>, %arg3: memref<12xi32, #tpu.memory_space<smem>>) -> (i32, i32) {
    %c3_i32 = arith.constant 3 : i32
    %0 = arith.muli %arg0, %c3_i32 : i32
    %1 = arith.addi %0, %arg1 : i32
    %2 = arith.index_cast %1 : i32 to index
    %3 = memref.load %arg3[%2] : memref<12xi32, #tpu.memory_space<smem>>
    %c0_i32 = arith.constant 0 : i32
    return %arg0, %3 : i32, i32
  }
  func.func @transform_1(%arg0: i32, %arg1: i32, %arg2: memref<4xi32, #tpu.memory_space<smem>>, %arg3: memref<12xi32, #tpu.memory_space<smem>>) -> (i32, i32) {
    %c3_i32 = arith.constant 3 : i32
    %0 = arith.muli %arg0, %c3_i32 : i32
    %1 = arith.addi %0, %arg1 : i32
    %2 = arith.index_cast %1 : i32 to index
    %3 = memref.load %arg3[%2] : memref<12xi32, #tpu.memory_space<smem>>
    %c0_i32 = arith.constant 0 : i32
    %c0_i32_0 = arith.constant 0 : i32
    return %3, %c0_i32 : i32, i32
  }
  func.func @transform_2(%arg0: i32, %arg1: i32, %arg2: memref<4xi32, #tpu.memory_space<smem>>, %arg3: memref<12xi32, #tpu.memory_space<smem>>) -> (i32, i32) {
    %c0_i32 = arith.constant 0 : i32
    %c0_i32_0 = arith.constant 0 : i32
    %c0_i32_1 = arith.constant 0 : i32
    return %c0_i32, %c0_i32_0 : i32, i32
  }
  func.func @transform_3(%arg0: i32, %arg1: i32, %arg2: memref<4xi32, #tpu.memory_space<smem>>, %arg3: memref<12xi32, #tpu.memory_space<smem>>) -> (i32, i32) {
    %c0_i32 = arith.constant 0 : i32
    %c0_i32_0 = arith.constant 0 : i32
    %c0_i32_1 = arith.constant 0 : i32
    return %c0_i32, %c0_i32_0 : i32, i32
  }
  func.func @transform_4(%arg0: i32, %arg1: i32, %arg2: memref<4xi32, #tpu.memory_space<smem>>, %arg3: memref<12xi32, #tpu.memory_space<smem>>) -> (i32, i32) {
    %c0_i32 = arith.constant 0 : i32
    %c0_i32_0 = arith.constant 0 : i32
    return %arg0, %c0_i32 : i32, i32
  }
}

</mosaic_0001>

<llo_original>
// kernel: tpu_custom_call.1
$region0: #{tpu_custom_call.1}
  #allocation0 [shape = 'u32[]', space=smem, size = 0x4, offset = 0x4, fixed_abs, tag = 'smem constant byte address 0x4 - core index']
  #allocation1 [shape = 'u32[144,128]{1,0:T(1,128)}', space=vmem, size = 0x12000, scoped, tag = 'internal scratch']
  #allocation2 [shape = 'f32[512,128]{1,0:T(8,128)}', space=vmem, size = 0x40000, scoped, tag = 'scratch operand']
  #allocation3 [shape = 's32[1]{0}', space=sflag, size = 0x4, scoped, tag = 'scoped memory for tpu_custom_call.1']
  #allocation4 [shape = 'u8[512]{0}', space=smem, size = 0x200, scoped, tag = 'prefetched SMEM operand 0']
  #allocation5 [shape = 'u8[512]{0}', space=smem, size = 0x200, scoped, tag = 'prefetched SMEM operand 1']
  %s0 = inlined_call_operand.hbm [shape: s32[4], index: 0, kind: input, shape index: {}]
  %s1 = inlined_call_operand.hbm [shape: s32[12], index: 1, kind: input, shape index: {}]
  %s2 = inlined_call_operand.hbm [shape: bf16[2048,2048], index: 2, kind: input, shape index: {}]
  %s3 = inlined_call_operand.hbm [shape: bf16[2048,128], index: 3, kind: input, shape index: {}]
  %s4 = inlined_call_operand.hbm [shape: bf16[128,128], index: 4, kind: input, shape index: {}]
  %s5 = inlined_call_operand.hbm [shape: f32[1,128], index: 5, kind: input, shape index: {}]
  %s6 = inlined_call_operand.hbm [shape: f32[2048,128], index: 6, kind: output, shape index: {}]
  %s7 = sld [smem:[#allocation0]]
  $region77: #{tpu_custom_call.1} parent=0
    _
  %s9 = ssub.s32 1, %s7
  %s10 = scalar_select 0, %s9, %s7
  %12 = dma.hbm_to_smem %s0, 16, [#allocation4], [#allocation3]
  %14 = dma.hbm_to_smem %s1, 16, [#allocation5], [#allocation3]
  %15 = dma.done [#allocation3], 32
  %16 = sfence
  $region1: #{tpu_custom_call.1} parent=0
    #allocation6 [shape = 'u8[1048576]{0}', space=vmem, size = 0x100000, scoped, tag = 'input window, operand 2']
    #allocation7 [shape = 's32[2]{0}', space=sflag, size = 0x8, scoped, tag = 'scoped memory for tpu_custom_call.1']
    #allocation8 [shape = 's32[2]{0}', space=sflag, size = 0x8, scoped, tag = 'scoped memory for tpu_custom_call.1']
    #allocation9 [shape = 'u8[262144]{0}', space=vmem, size = 0x40000, scoped, tag = 'input window, operand 3']
    #allocation10 [shape = 's32[2]{0}', space=sflag, size = 0x8, scoped, tag = 'scoped memory for tpu_custom_call.1']
    #allocation11 [shape = 'u8[32768]{0}', space=vmem, size = 0x8000, scoped, tag = 'input window, operand 4, single buffered']
    #allocation12 [shape = 'u8[512]{0}', space=vmem, size = 0x400, scoped, tag = 'input window, operand 5, single buffered']
    #allocation13 [shape = 's32[1]{0}', space=sflag, size = 0x4, scoped, tag = 'scoped memory for tpu_custom_call.1']
    #allocation14 [shape = 'u8[524288]{0}', space=vmem, size = 0x80000, scoped, tag = 'output window, operand 0']
    %17 = vsyncpa [#allocation7], 0
    %s18 = scalar_lea.sflag [#allocation7], 1
    %19 = vsyncpa %s18, 0
    %20 = vsyncpa [#allocation10], 0
    %s21 = scalar_lea.sflag [#allocation10], 1
    %22 = vsyncpa %s21, 0
    %23 = vsyncpa [#allocation13], 0
    %24 = vsyncpa [#allocation8], 0
    %s25 = scalar_lea.sflag [#allocation8], 1
    %26 = vsyncpa %s25, 0
    loop: start=0, step=1, limit=14
    $region2: #{tpu_custom_call.1} parent=1 // loop_pre_header
      _
    $region3: #{tpu_custom_call.1} parent=1 // loop_header
      %s28 = sphi 0, %s32
      %p29 = scmp.ge.s32.totalorder %s28, 14
      %s35 = sphi 0, %s47
      %s36 = sphi 0, %s43
      %s37 = sphi 0, %s35
      %s38 = sphi 0, %s36
      %s39 = sphi 0, %s37
      %s40 = sphi 0, %s38
      %s58 = sphi 0, %s60
      %s61 = sphi 0, %s58
      %s62 = sphi 0, %s61
      %s78 = sphi 0, %s62
      %s90 = sphi 0, %s92
      %s93 = sphi 0, %s90
      %s94 = sphi 0, %s93
      %s110 = sphi 0, %s94
      %s114 = sphi 0, %s114
      %s116 = sphi 0, %s114
      %s117 = sphi 0, %s116
      %s131 = sphi 0, %s117
      %s135 = sphi 0, %s135
      %s137 = sphi 0, %s135
      %s138 = sphi 0, %s137
      %s152 = sphi 0, %s138
      %s158 = sphi 0, %s160
      %s161 = sphi 0, %s158
      %s162 = sphi 0, %s161
      %s178 = sphi 0, %s162
    $region4: #{tpu_custom_call.1} parent=1 // loop_header_branch
      %31 = sbr.rel (%p29) target = $region8
    $region5: #{tpu_custom_call.1} parent=1 // loop_body
      %s33 = ssub.s32 %s28, 1
      %s34 = ssub.s32 %s28, 2
      %s41 = sadd.s32 1, %s36
      %p42 = scmp.ge.s32.totalorder %s41, 3
      %s43 = scalar_select %p42, 0, %s41
      %s44 = sadd.s32 1, %s35
      %s45 = scalar_select %p42, %s44, %s35
      %p46 = scmp.ge.s32.totalorder %s45, 4
      %s47 = scalar_select %p46, 0, %s45
      %s48 = smul.u32 %s35, 3
      %s49 = sadd.s32 %s48, %s36
      %s50 = sld [smem:[#allocation5 + %s49]]
      %s51 = smul.u32 %s47, 3
      %s52 = sadd.s32 %s51, %s43
      %s53 = sld [smem:[#allocation5 + %s52]]
      %s54 = ssub.s32 %s35, %s47
      %s55 = ssub.s32 %s50, %s53
      %s56 = sor.u32 %s54, %s55
      %p57 = scmp.eq.s32.totalorder %s56, 0
      %s59 = sadd.s32 %s58, 1
      %s60 = scalar_select %p57, %s58, %s59
      %p63 = pneg %p57
      %p64 = scmp.eq.s32.totalorder %s28, 11
      %p65 = por %p63, %p64
      %p66 = scmp.ne.s32.totalorder %s58, %s61
      %p67 = scmp.eq.s32.totalorder %s28, 0
      %p68 = por %p66, %p67
      %p69 = scmp.ne.s32.totalorder %s58, %s61
      %p70 = scmp.eq.s32.totalorder %s33, 11
      %p71 = por %p69, %p70
      %p72 = scmp.ne.s32.totalorder %s61, %s62
      %p73 = scmp.eq.s32.totalorder %s33, 0
      %p74 = por %p72, %p73
      %p75 = scmp.ne.s32.totalorder %s61, %s62
      %p76 = scmp.eq.s32.totalorder %s34, 11
      %p77 = por %p75, %p76
      %p79 = scmp.ne.s32.totalorder %s62, %s78
      %p80 = scmp.eq.s32.totalorder %s34, 0
      %p81 = por %p79, %p80
      %s82 = smul.u32 %s35, 3
      %s83 = sadd.s32 %s82, %s36
      %s84 = sld [smem:[#allocation5 + %s83]]
      %s85 = smul.u32 %s47, 3
      %s86 = sadd.s32 %s85, %s43
      %s87 = sld [smem:[#allocation5 + %s86]]
      %s88 = ssub.s32 %s84, %s87
      %p89 = scmp.eq.s32.totalorder %s88, 0
      %s91 = sadd.s32 %s90, 1
      %s92 = scalar_select %p89, %s90, %s91
      %p95 = pneg %p89
      %p96 = scmp.eq.s32.totalorder %s28, 11
      %p97 = por %p95, %p96
      %p98 = scmp.ne.s32.totalorder %s90, %s93
      %p99 = scmp.eq.s32.totalorder %s28, 0
      %p100 = por %p98, %p99
      %p101 = scmp.ne.s32.totalorder %s90, %s93
      %p102 = scmp.eq.s32.totalorder %s33, 11
      %p103 = por %p101, %p102
      %p104 = scmp.ne.s32.totalorder %s93, %s94
      %p105 = scmp.eq.s32.totalorder %s33, 0
      %p106 = por %p104, %p105
      %p107 = scmp.ne.s32.totalorder %s93, %s94
      %p108 = scmp.eq.s32.totalorder %s34, 11
      %p109 = por %p107, %p108
      %p111 = scmp.ne.s32.totalorder %s94, %s110
      %p112 = scmp.eq.s32.totalorder %s34, 0
      %p113 = por %p111, %p112
      %s115 = sadd.s32 %s114, 1
      %p118 = scmp.eq.s32.totalorder %s28, 11
      %p119 = scmp.ne.s32.totalorder %s114, %s116
      %p120 = scmp.eq.s32.totalorder %s28, 0
      %p121 = por %p119, %p120
      %p122 = scmp.ne.s32.totalorder %s114, %s116
      %p123 = scmp.eq.s32.totalorder %s33, 11
      %p124 = por %p122, %p123
      %p125 = scmp.ne.s32.totalorder %s116, %s117
      %p126 = scmp.eq.s32.totalorder %s33, 0
      %p127 = por %p125, %p126
      %p128 = scmp.ne.s32.totalorder %s116, %s117
      %p129 = scmp.eq.s32.totalorder %s34, 11
      %p130 = por %p128, %p129
      %p132 = scmp.ne.s32.totalorder %s117, %s131
      %p133 = scmp.eq.s32.totalorder %s34, 0
      %p134 = por %p132, %p133
      %s136 = sadd.s32 %s135, 1
      %p139 = scmp.eq.s32.totalorder %s28, 11
      %p140 = scmp.ne.s32.totalorder %s135, %s137
      %p141 = scmp.eq.s32.totalorder %s28, 0
      %p142 = por %p140, %p141
      %p143 = scmp.ne.s32.totalorder %s135, %s137
      %p144 = scmp.eq.s32.totalorder %s33, 11
      %p145 = por %p143, %p144
      %p146 = scmp.ne.s32.totalorder %s137, %s138
      %p147 = scmp.eq.s32.totalorder %s33, 0
      %p148 = por %p146, %p147
      %p149 = scmp.ne.s32.totalorder %s137, %s138
      %p150 = scmp.eq.s32.totalorder %s34, 11
      %p151 = por %p149, %p150
      %p153 = scmp.ne.s32.totalorder %s138, %s152
      %p154 = scmp.eq.s32.totalorder %s34, 0
      %p155 = por %p153, %p154
      %s156 = ssub.s32 %s35, %s47
      %p157 = scmp.eq.s32.totalorder %s156, 0
      %s159 = sadd.s32 %s158, 1
      %s160 = scalar_select %p157, %s158, %s159
      %p163 = pneg %p157
      %p164 = scmp.eq.s32.totalorder %s28, 11
      %p165 = por %p163, %p164
      %p166 = scmp.ne.s32.totalorder %s158, %s161
      %p167 = scmp.eq.s32.totalorder %s28, 0
      %p168 = por %p166, %p167
      %p169 = scmp.ne.s32.totalorder %s158, %s161
      %p170 = scmp.eq.s32.totalorder %s33, 11
      %p171 = por %p169, %p170
      %p172 = scmp.ne.s32.totalorder %s161, %s162
      %p173 = scmp.eq.s32.totalorder %s33, 0
      %p174 = por %p172, %p173
      %p175 = scmp.ne.s32.totalorder %s161, %s162
      %p176 = scmp.eq.s32.totalorder %s34, 11
      %p177 = por %p175, %p176
      %p179 = scmp.ne.s32.totalorder %s162, %s178
      %p180 = scmp.eq.s32.totalorder %s34, 0
      %p181 = por %p179, %p180
      %p182 = scmp.le.s32.totalorder 1, %s28
      %p183 = scmp.lt.s32.totalorder %s28, 13
      %p184 = pnand %p182, %p183
      %p185 = pneg %p184
      // Predicated region
      $region9: #{tpu_custom_call.1} parent=5 // pred_check
        _
      $region10: #{tpu_custom_call.1} parent=5 // pred_check_branch
        %187 = sbr.rel (%p184) target = $region12
      $region11: #{tpu_custom_call.1} parent=5 // pred_region
        %s188 = ssub.s32 %s28, 1
        // Predicated region
        $region13: #{tpu_custom_call.1} parent=11 // pred_check
          %p189 = pneg %p127
        $region14: #{tpu_custom_call.1} parent=11 // pred_check_branch
          %191 = sbr.rel (%p189) target = $region16
        $region15: #{tpu_custom_call.1} parent=11 // pred_region
          %s193 = ssub.s32 1024, 1024
          %194 = vsyncadd [#allocation10], %s193
          %s195 = sshll.u32 [#allocation11], 4
          %s196 = int_to_ptr.vmem [resolvable:$true] %s195
          %201 = dma.hbm_to_vmem [thread:$0]  %s4, 1024, %s196, [#allocation10], 64, 64, 4
        $region16: #{tpu_custom_call.1} parent=11 // pred_fallthru
          _
        // Predicated region
        $region17: #{tpu_custom_call.1} parent=11 // pred_check
          %p202 = pneg %p148
        $region18: #{tpu_custom_call.1} parent=11 // pred_check_branch
          %204 = sbr.rel (%p202) target = $region20
        $region19: #{tpu_custom_call.1} parent=11 // pred_region
          %s206 = ssub.s32 16, 16
          %207 = vsyncadd [#allocation13], %s206
          %s209 = sshll.u32 [#allocation12], 4
          %s210 = int_to_ptr.vmem [resolvable:$true] %s209
          %212 = dma.hbm_to_vmem [thread:$0]  %s5, 16, %s210, [#allocation13]
        $region20: #{tpu_custom_call.1} parent=11 // pred_fallthru
          _
      $region12: #{tpu_custom_call.1} parent=5 // pred_fallthru
        _
      %p213 = scmp.lt.s32.totalorder %s28, 12
      // Predicated region
      $region21: #{tpu_custom_call.1} parent=5 // pred_check
        %p214 = pneg %p213
      $region22: #{tpu_custom_call.1} parent=5 // pred_check_branch
        %216 = sbr.rel (%p214) target = $region24
      $region23: #{tpu_custom_call.1} parent=5 // pred_region
        // Predicated region
        $region25: #{tpu_custom_call.1} parent=23 // pred_check
          %p217 = pneg %p68
        $region26: #{tpu_custom_call.1} parent=23 // pred_check_branch
          %219 = sbr.rel (%p217) target = $region28
        $region27: #{tpu_custom_call.1} parent=23 // pred_region
          %s220 = sand.u32 %s58, 1
          %s221 = scalar_lea.sflag [#allocation7], %s220
          %s222 = sand.u32 %s58, 1
          %s223 = smul.addr %s222, 1024
          %s224 = scalar_lea.vmem [#allocation6], %s223
          %s225 = smul.u32 %s35, 3
          %s226 = sadd.s32 %s225, %s36
          %s227 = sld [smem:[#allocation5 + %s226]]
          %s228 = smul.u32 64, %s35
          %s229 = smul.u32 4, %s227
          %s231 = ssub.s32 16384, 16384
          %232 = vsyncadd %s221, %s231
          %s233 = smul.addr %s228, 16
          %s234 = sadd.s32 %s229, %s233
          %s235 = smul.addr %s234, 64
          %s236 = scalar_lea.hbm %s2, %s235
          %s237 = sshll.u32 %s224, 4
          %s238 = int_to_ptr.vmem [resolvable:$true] %s237
          %243 = dma.hbm_to_vmem [thread:$0]  %s236, 16384, %s238, %s221, 1024, 256, 16
        $region28: #{tpu_custom_call.1} parent=23 // pred_fallthru
          _
        // Predicated region
        $region29: #{tpu_custom_call.1} parent=23 // pred_check
          %p244 = pneg %p100
        $region30: #{tpu_custom_call.1} parent=23 // pred_check_branch
          %246 = sbr.rel (%p244) target = $region32
        $region31: #{tpu_custom_call.1} parent=23 // pred_region
          %s247 = sand.u32 %s28, 1
          %s248 = scalar_lea.sflag [#allocation10], %s247
          %s249 = sand.u32 %s90, 1
          %s250 = smul.addr %s249, 256
          %s251 = scalar_lea.vmem [#allocation9], %s250
          %s252 = smul.u32 %s35, 3
          %s253 = sadd.s32 %s252, %s36
          %s254 = sld [smem:[#allocation5 + %s253]]
          %s255 = smul.u32 64, %s254
          %s257 = ssub.s32 4096, 4096
          %258 = vsyncadd %s248, %s257
          %s259 = smul.addr %s255, 64
          %s260 = scalar_lea.hbm %s3, %s259
          %s261 = sshll.u32 %s251, 4
          %s262 = int_to_ptr.vmem [resolvable:$true] %s261
          %267 = dma.hbm_to_vmem [thread:$0]  %s260, 4096, %s262, %s248, 64, 64, 4
        $region32: #{tpu_custom_call.1} parent=23 // pred_fallthru
          _
      $region24: #{tpu_custom_call.1} parent=5 // pred_fallthru
        _
      %p268 = scmp.le.s32.totalorder 1, %s28
      %p269 = scmp.lt.s32.totalorder %s28, 13
      %p270 = pnand %p268, %p269
      %p271 = pneg %p270
      // Predicated region
      $region33: #{tpu_custom_call.1} parent=5 // pred_check
        _
      $region34: #{tpu_custom_call.1} parent=5 // pred_check_branch
        %273 = sbr.rel (%p270) target = $region36
      $region35: #{tpu_custom_call.1} parent=5 // pred_region
        %s274 = ssub.s32 %s28, 1
        %s275 = sand.u32 %s61, 1
        %s276 = scalar_lea.sflag [#allocation7], %s275
        %s277 = sand.u32 %s61, 1
        %s278 = smul.addr %s277, 1024
        %s279 = scalar_lea.vmem [#allocation6], %s278
        // Predicated region
        $region37: #{tpu_custom_call.1} parent=35 // pred_check
          %p280 = pneg %p74
        $region38: #{tpu_custom_call.1} parent=35 // pred_check_branch
          %282 = sbr.rel (%p280) target = $region40
        $region39: #{tpu_custom_call.1} parent=35 // pred_region
          %283 = dma.done %s276, 16384
        $region40: #{tpu_custom_call.1} parent=35 // pred_fallthru
          _
        %s284 = sand.u32 %s33, 1
        %s285 = scalar_lea.sflag [#allocation10], %s284
        %s286 = sand.u32 %s93, 1
        %s287 = smul.addr %s286, 256
        %s288 = scalar_lea.vmem [#allocation9], %s287
        // Predicated region
        $region41: #{tpu_custom_call.1} parent=35 // pred_check
          %p289 = pneg %p106
        $region42: #{tpu_custom_call.1} parent=35 // pred_check_branch
          %291 = sbr.rel (%p289) target = $region44
        $region43: #{tpu_custom_call.1} parent=35 // pred_region
          %292 = dma.done %s285, 4096
        $region44: #{tpu_custom_call.1} parent=35 // pred_fallthru
          _
        // Predicated region
        $region45: #{tpu_custom_call.1} parent=35 // pred_check
          %p293 = pneg %p127
        $region46: #{tpu_custom_call.1} parent=35 // pred_check_branch
          %295 = sbr.rel (%p293) target = $region48
        $region47: #{tpu_custom_call.1} parent=35 // pred_region
          %296 = dma.done [#allocation10], 1024
        $region48: #{tpu_custom_call.1} parent=35 // pred_fallthru
          _
        // Predicated region
        $region49: #{tpu_custom_call.1} parent=35 // pred_check
          %p297 = pneg %p148
        $region50: #{tpu_custom_call.1} parent=35 // pred_check_branch
          %299 = sbr.rel (%p297) target = $region52
        $region51: #{tpu_custom_call.1} parent=35 // pred_region
          %300 = dma.done [#allocation13], 16
        $region52: #{tpu_custom_call.1} parent=35 // pred_fallthru
          _
        %s301 = sand.u32 %s61, 1
        %s302 = scalar_lea.sflag [#allocation7], %s301
        %s303 = sand.u32 %s61, 1
        %s304 = smul.addr %s303, 1024
        %s305 = scalar_lea.vmem [#allocation6], %s304
        %p306 = pneg %p74
        %p307 = pneg %p71
        %s308 = sand.u32 %s33, 1
        %s309 = scalar_lea.sflag [#allocation10], %s308
        %s310 = sand.u32 %s93, 1
        %s311 = smul.addr %s310, 256
        %s312 = scalar_lea.vmem [#allocation9], %s311
        %p313 = pneg %p106
        %p314 = pneg %p103
        %p315 = pneg %p127
        %p316 = pneg %p124
        %p317 = pneg %p148
        %p318 = pneg %p145
        %p319 = pneg %p174
        %p320 = pneg %p171
        %s321 = sand.u32 %s161, 1
        %s322 = scalar_lea.sflag [#allocation8], %s321
        %s323 = sand.u32 %s161, 1
        %s324 = smul.addr %s323, 512
        %s325 = scalar_lea.vmem [#allocation14], %s324
        %s326 = smul.u32 %s37, 3
        %s327 = sadd.s32 %s326, %s38
        %s328 = sld [smem:[#allocation5 + %s327]]
        %s329 = smul.u32 64, %s37
        %s330 = smul.u32 4, %s328
        %s331 = smul.u32 %s37, 3
        %s332 = sadd.s32 %s331, %s38
        %s333 = sld [smem:[#allocation5 + %s332]]
        %s334 = smul.u32 64, %s333
        %s335 = smul.u32 64, %s37
        %p337 = scmp.eq.s32.totalorder %s38, 0
        // Predicated region
        $region53: #{tpu_custom_call.1} parent=35 // pred_check
          %p338 = pneg %p337
        $region54: #{tpu_custom_call.1} parent=35 // pred_check_branch
          %340 = sbr.rel (%p338) target = $region56
        $region55: #{tpu_custom_call.1} parent=35 // pred_region
          %341 = vst [vmem:[#allocation2] sm:$0xff] 0.0
          %342 = vst [vmem:[#allocation2 + $0x8] sm:$0xff] 0.0
          %343 = vst [vmem:[#allocation2 + $0x10] sm:$0xff] 0.0
          %344 = vst [vmem:[#allocation2 + $0x18] sm:$0xff] 0.0
          %345 = vst [vmem:[#allocation2 + $0x20] sm:$0xff] 0.0
          %346 = vst [vmem:[#allocation2 + $0x28] sm:$0xff] 0.0
          %347 = vst [vmem:[#allocation2 + $0x30] sm:$0xff] 0.0
          %348 = vst [vmem:[#allocation2 + $0x38] sm:$0xff] 0.0
          %349 = vst [vmem:[#allocation2 + $0x40] sm:$0xff] 0.0
          %350 = vst [vmem:[#allocation2 + $0x48] sm:$0xff] 0.0
          %351 = vst [vmem:[#allocation2 + $0x50] sm:$0xff] 0.0
          %352 = vst [vmem:[#allocation2 + $0x58] sm:$0xff] 0.0
          %353 = vst [vmem:[#allocation2 + $0x60] sm:$0xff] 0.0
          %354 = vst [vmem:[#allocation2 + $0x68] sm:$0xff] 0.0
          %355 = vst [vmem:[#allocation2 + $0x70] sm:$0xff] 0.0
          %356 = vst [vmem:[#allocation2 + $0x78] sm:$0xff] 0.0
          %357 = vst [vmem:[#allocation2 + $0x80] sm:$0xff] 0.0
          %358 = vst [vmem:[#allocation2 + $0x88] sm:$0xff] 0.0
          %359 = vst [vmem:[#allocation2 + $0x90] sm:$0xff] 0.0
          %360 = vst [vmem:[#allocation2 + $0x98] sm:$0xff] 0.0
          %361 = vst [vmem:[#allocation2 + $0xa0] sm:$0xff] 0.0
          %362 = vst [vmem:[#allocation2 + $0xa8] sm:$0xff] 0.0
          %363 = vst [vmem:[#allocation2 + $0xb0] sm:$0xff] 0.0
          %364 = vst [vmem:[#allocation2 + $0xb8] sm:$0xff] 0.0
          %365 = vst [vmem:[#allocation2 + $0xc0] sm:$0xff] 0.0
          %366 = vst [vmem:[#allocation2 + $0xc8] sm:$0xff] 0.0
          %367 = vst [vmem:[#allocation2 + $0xd0] sm:$0xff] 0.0
          %368 = vst [vmem:[#allocation2 + $0xd8] sm:$0xff] 0.0
          %369 = vst [vmem:[#allocation2 + $0xe0] sm:$0xff] 0.0
          %370 = vst [vmem:[#allocation2 + $0xe8] sm:$0xff] 0.0
          %371 = vst [vmem:[#allocation2 + $0xf0] sm:$0xff] 0.0
          %372 = vst [vmem:[#allocation2 + $0xf8] sm:$0xff] 0.0
          %373 = vst [vmem:[#allocation2 + $0x100] sm:$0xff] 0.0
          %374 = vst [vmem:[#allocation2 + $0x108] sm:$0xff] 0.0
          %375 = vst [vmem:[#allocation2 + $0x110] sm:$0xff] 0.0
          %376 = vst [vmem:[#allocation2 + $0x118] sm:$0xff] 0.0
          %377 = vst [vmem:[#allocation2 + $0x120] sm:$0xff] 0.0
          %378 = vst [vmem:[#allocation2 + $0x128] sm:$0xff] 0.0
          %379 = vst [vmem:[#allocation2 + $0x130] sm:$0xff] 0.0
          %380 = vst [vmem:[#allocation2 + $0x138] sm:$0xff] 0.0
          %381 = vst [vmem:[#allocation2 + $0x140] sm:$0xff] 0.0
          %382 = vst [vmem:[#allocation2 + $0x148] sm:$0xff] 0.0
          %383 = vst [vmem:[#allocation2 + $0x150] sm:$0xff] 0.0
          %384 = vst [vmem:[#allocation2 + $0x158] sm:$0xff] 0.0
          %385 = vst [vmem:[#allocation2 + $0x160] sm:$0xff] 0.0
          %386 = vst [vmem:[#allocation2 + $0x168] sm:$0xff] 0.0
          %387 = vst [vmem:[#allocation2 + $0x170] sm:$0xff] 0.0
          %388 = vst [vmem:[#allocation2 + $0x178] sm:$0xff] 0.0
          %389 = vst [vmem:[#allocation2 + $0x180] sm:$0xff] 0.0
          %390 = vst [vmem:[#allocation2 + $0x188] sm:$0xff] 0.0
          %391 = vst [vmem:[#allocation2 + $0x190] sm:$0xff] 0.0
          %392 = vst [vmem:[#allocation2 + $0x198] sm:$0xff] 0.0
          %393 = vst [vmem:[#allocation2 + $0x1a0] sm:$0xff] 0.0
          %394 = vst [vmem:[#allocation2 + $0x1a8] sm:$0xff] 0.0
          %395 = vst [vmem:[#allocation2 + $0x1b0] sm:$0xff] 0.0
          %396 = vst [vmem:[#allocation2 + $0x1b8] sm:$0xff] 0.0
          %397 = vst [vmem:[#allocation2 + $0x1c0] sm:$0xff] 0.0
          %398 = vst [vmem:[#allocation2 + $0x1c8] sm:$0xff] 0.0
          %399 = vst [vmem:[#allocation2 + $0x1d0] sm:$0xff] 0.0
          %400 = vst [vmem:[#allocation2 + $0x1d8] sm:$0xff] 0.0
          %401 = vst [vmem:[#allocation2 + $0x1e0] sm:$0xff] 0.0
          %402 = vst [vmem:[#allocation2 + $0x1e8] sm:$0xff] 0.0
          %403 = vst [vmem:[#allocation2 + $0x1f0] sm:$0xff] 0.0
          %404 = vst [vmem:[#allocation2 + $0x1f8] sm:$0xff] 0.0
        $region56: #{tpu_custom_call.1} parent=35 // pred_fallthru
          _
        %s405 = sld [smem:[#allocation4 + %s37]]
        %p406 = scmp.lt.s32.totalorder %s38, %s405
        // Predicated region
        $region57: #{tpu_custom_call.1} parent=35 // pred_check
          %p407 = pneg %p406
        $region58: #{tpu_custom_call.1} parent=35 // pred_check_branch
          %409 = sbr.rel (%p407) target = $region60
        $region59: #{tpu_custom_call.1} parent=35 // pred_region
          %v410 = vld [vmem:[%s288] sm:$0xf]
          %v411 = vld [vmem:[%s288 + $0x4] sm:$0xf]
          %v412 = vld [vmem:[%s288 + $0x8] sm:$0xf]
          %v413 = vld [vmem:[%s288 + $0xc] sm:$0xf]
          %v414 = vld [vmem:[%s288 + $0x10] sm:$0xf]
          %v415 = vld [vmem:[%s288 + $0x14] sm:$0xf]
          %v416 = vld [vmem:[%s288 + $0x18] sm:$0xf]
          %v417 = vld [vmem:[%s288 + $0x1c] sm:$0xf]
          %v418 = vld [vmem:[%s288 + $0x20] sm:$0xf]
          %v419 = vld [vmem:[%s288 + $0x24] sm:$0xf]
          %v420 = vld [vmem:[%s288 + $0x28] sm:$0xf]
          %v421 = vld [vmem:[%s288 + $0x2c] sm:$0xf]
          %v422 = vld [vmem:[%s288 + $0x30] sm:$0xf]
          %v423 = vld [vmem:[%s288 + $0x34] sm:$0xf]
          %v424 = vld [vmem:[%s288 + $0x38] sm:$0xf]
          %v425 = vld [vmem:[%s288 + $0x3c] sm:$0xf]
          %v426 = vld [vmem:[%s288 + $0x40] sm:$0xf]
          %v427 = vld [vmem:[%s288 + $0x44] sm:$0xf]
          %v428 = vld [vmem:[%s288 + $0x48] sm:$0xf]
          %v429 = vld [vmem:[%s288 + $0x4c] sm:$0xf]
          %v430 = vld [vmem:[%s288 + $0x50] sm:$0xf]
          %v431 = vld [vmem:[%s288 + $0x54] sm:$0xf]
          %v432 = vld [vmem:[%s288 + $0x58] sm:$0xf]
          %v433 = vld [vmem:[%s288 + $0x5c] sm:$0xf]
          %v434 = vld [vmem:[%s288 + $0x60] sm:$0xf]
          %v435 = vld [vmem:[%s288 + $0x64] sm:$0xf]
          %v436 = vld [vmem:[%s288 + $0x68] sm:$0xf]
          %v437 = vld [vmem:[%s288 + $0x6c] sm:$0xf]
          %v438 = vld [vmem:[%s288 + $0x70] sm:$0xf]
          %v439 = vld [vmem:[%s288 + $0x74] sm:$0xf]
          %v440 = vld [vmem:[%s288 + $0x78] sm:$0xf]
          %v441 = vld [vmem:[%s288 + $0x7c] sm:$0xf]
          %v442 = vld [vmem:[%s288 + $0x80] sm:$0xf]
          %v443 = vld [vmem:[%s288 + $0x84] sm:$0xf]
          %v444 = vld [vmem:[%s288 + $0x88] sm:$0xf]
          %v445 = vld [vmem:[%s288 + $0x8c] sm:$0xf]
          %v446 = vld [vmem:[%s288 + $0x90] sm:$0xf]
          %v447 = vld [vmem:[%s288 + $0x94] sm:$0xf]
          %v448 = vld [vmem:[%s288 + $0x98] sm:$0xf]
          %v449 = vld [vmem:[%s288 + $0x9c] sm:$0xf]
          %v450 = vld [vmem:[%s288 + $0xa0] sm:$0xf]
          %v451 = vld [vmem:[%s288 + $0xa4] sm:$0xf]
          %v452 = vld [vmem:[%s288 + $0xa8] sm:$0xf]
          %v453 = vld [vmem:[%s288 + $0xac] sm:$0xf]
          %v454 = vld [vmem:[%s288 + $0xb0] sm:$0xf]
          %v455 = vld [vmem:[%s288 + $0xb4] sm:$0xf]
          %v456 = vld [vmem:[%s288 + $0xb8] sm:$0xf]
          %v457 = vld [vmem:[%s288 + $0xbc] sm:$0xf]
          %v458 = vld [vmem:[%s288 + $0xc0] sm:$0xf]
          %v459 = vld [vmem:[%s288 + $0xc4] sm:$0xf]
          %v460 = vld [vmem:[%s288 + $0xc8] sm:$0xf]
          %v461 = vld [vmem:[%s288 + $0xcc] sm:$0xf]
          %v462 = vld [vmem:[%s288 + $0xd0] sm:$0xf]
          %v463 = vld [vmem:[%s288 + $0xd4] sm:$0xf]
          %v464 = vld [vmem:[%s288 + $0xd8] sm:$0xf]
          %v465 = vld [vmem:[%s288 + $0xdc] sm:$0xf]
          %v466 = vld [vmem:[%s288 + $0xe0] sm:$0xf]
          %v467 = vld [vmem:[%s288 + $0xe4] sm:$0xf]
          %v468 = vld [vmem:[%s288 + $0xe8] sm:$0xf]
          %v469 = vld [vmem:[%s288 + $0xec] sm:$0xf]
          %v470 = vld [vmem:[%s288 + $0xf0] sm:$0xf]
          %v471 = vld [vmem:[%s288 + $0xf4] sm:$0xf]
          %v472 = vld [vmem:[%s288 + $0xf8] sm:$0xf]
          %v473 = vld [vmem:[%s288 + $0xfc] sm:$0xf]
          %v474 = vld [vmem:[#allocation11] sm:$0xf]
          %v475 = vld [vmem:[#allocation11 + $0x4] sm:$0xf]
          %v476 = vld [vmem:[#allocation11 + $0x8] sm:$0xf]
          %v477 = vld [vmem:[#allocation11 + $0xc] sm:$0xf]
          %v478 = vld [vmem:[#allocation11 + $0x10] sm:$0xf]
          %v479 = vld [vmem:[#allocation11 + $0x14] sm:$0xf]
          %v480 = vld [vmem:[#allocation11 + $0x18] sm:$0xf]
          %v481 = vld [vmem:[#allocation11 + $0x1c] sm:$0xf]
          %v482 = vld [vmem:[#allocation11 + $0x20] sm:$0xf]
          %v483 = vld [vmem:[#allocation11 + $0x24] sm:$0xf]
          %v484 = vld [vmem:[#allocation11 + $0x28] sm:$0xf]
          %v485 = vld [vmem:[#allocation11 + $0x2c] sm:$0xf]
          %v486 = vld [vmem:[#allocation11 + $0x30] sm:$0xf]
          %v487 = vld [vmem:[#allocation11 + $0x34] sm:$0xf]
          %v488 = vld [vmem:[#allocation11 + $0x38] sm:$0xf]
          %v489 = vld [vmem:[#allocation11 + $0x3c] sm:$0xf]
          %v554 = vunpack.c.l.b16 %v410
          %v555 = vunpack.c.l.b16 %v411
          %v556 = vunpack.c.l.b16 %v412
          %v557 = vunpack.c.l.b16 %v413
          %v558 = vunpack.c.l.b16 %v414
          %v559 = vunpack.c.l.b16 %v415
          %v560 = vunpack.c.l.b16 %v416
          %v561 = vunpack.c.l.b16 %v417
          %v562 = vunpack.c.l.b16 %v418
          %v563 = vunpack.c.l.b16 %v419
          %v564 = vunpack.c.l.b16 %v420
          %v565 = vunpack.c.l.b16 %v421
          %v566 = vunpack.c.l.b16 %v422
          %v567 = vunpack.c.l.b16 %v423
          %v568 = vunpack.c.l.b16 %v424
          %v569 = vunpack.c.l.b16 %v425
          %v570 = vunpack.c.l.b16 %v426
          %v571 = vunpack.c.l.b16 %v427
          %v572 = vunpack.c.l.b16 %v428
          %v573 = vunpack.c.l.b16 %v429
          %v574 = vunpack.c.l.b16 %v430
          %v575 = vunpack.c.l.b16 %v431
          %v576 = vunpack.c.l.b16 %v432
          %v577 = vunpack.c.l.b16 %v433
          %v578 = vunpack.c.l.b16 %v434
          %v579 = vunpack.c.l.b16 %v435
          %v580 = vunpack.c.l.b16 %v436
          %v581 = vunpack.c.l.b16 %v437
          %v582 = vunpack.c.l.b16 %v438
          %v583 = vunpack.c.l.b16 %v439
          %v584 = vunpack.c.l.b16 %v440
          %v585 = vunpack.c.l.b16 %v441
          %v586 = vunpack.c.l.b16 %v442
          %v587 = vunpack.c.l.b16 %v443
          %v588 = vunpack.c.l.b16 %v444
          %v589 = vunpack.c.l.b16 %v445
          %v590 = vunpack.c.l.b16 %v446
          %v591 = vunpack.c.l.b16 %v447
          %v592 = vunpack.c.l.b16 %v448
          %v593 = vunpack.c.l.b16 %v449
          %v594 = vunpack.c.l.b16 %v450
          %v595 = vunpack.c.l.b16 %v451
          %v596 = vunpack.c.l.b16 %v452
          %v597 = vunpack.c.l.b16 %v453
          %v598 = vunpack.c.l.b16 %v454
          %v599 = vunpack.c.l.b16 %v455
          %v600 = vunpack.c.l.b16 %v456
          %v601 = vunpack.c.l.b16 %v457
          %v602 = vunpack.c.l.b16 %v458
          %v603 = vunpack.c.l.b16 %v459
          %v604 = vunpack.c.l.b16 %v460
          %v605 = vunpack.c.l.b16 %v461
          %v606 = vunpack.c.l.b16 %v462
          %v607 = vunpack.c.l.b16 %v463
          %v608 = vunpack.c.l.b16 %v464
          %v609 = vunpack.c.l.b16 %v465
          %v610 = vunpack.c.l.b16 %v466
          %v611 = vunpack.c.l.b16 %v467
          %v612 = vunpack.c.l.b16 %v468
          %v613 = vunpack.c.l.b16 %v469
          %v614 = vunpack.c.l.b16 %v470
          %v615 = vunpack.c.l.b16 %v471
          %v616 = vunpack.c.l.b16 %v472
          %v617 = vunpack.c.l.b16 %v473
          %v618 = vpack.c.b16 %v555, %v554
          %v619 = vpack.c.b16 %v557, %v556
          %v620 = vpack.c.b16 %v559, %v558
          %v621 = vpack.c.b16 %v561, %v560
          %v622 = vpack.c.b16 %v563, %v562
          %v623 = vpack.c.b16 %v565, %v564
          %v624 = vpack.c.b16 %v567, %v566
          %v625 = vpack.c.b16 %v569, %v568
          %v626 = vpack.c.b16 %v571, %v570
          %v627 = vpack.c.b16 %v573, %v572
          %v628 = vpack.c.b16 %v575, %v574
          %v629 = vpack.c.b16 %v577, %v576
          %v630 = vpack.c.b16 %v579, %v578
          %v631 = vpack.c.b16 %v581, %v580
          %v632 = vpack.c.b16 %v583, %v582
          %v633 = vpack.c.b16 %v585, %v584
          %v634 = vpack.c.b16 %v587, %v586
          %v635 = vpack.c.b16 %v589, %v588
          %v636 = vpack.c.b16 %v591, %v590
          %v637 = vpack.c.b16 %v593, %v592
          %v638 = vpack.c.b16 %v595, %v594
          %v639 = vpack.c.b16 %v597, %v596
          %v640 = vpack.c.b16 %v599, %v598
          %v641 = vpack.c.b16 %v601, %v600
          %v642 = vpack.c.b16 %v603, %v602
          %v643 = vpack.c.b16 %v605, %v604
          %v644 = vpack.c.b16 %v607, %v606
          %v645 = vpack.c.b16 %v609, %v608
          %v646 = vpack.c.b16 %v611, %v610
          %v647 = vpack.c.b16 %v613, %v612
          %v648 = vpack.c.b16 %v615, %v614
          %v649 = vpack.c.b16 %v617, %v616
          %v698 = vunpack.c.l.b16 %v474
          %v699 = vunpack.c.l.b16 %v475
          %v700 = vunpack.c.l.b16 %v476
          %v701 = vunpack.c.l.b16 %v477
          %v702 = vunpack.c.l.b16 %v478
          %v703 = vunpack.c.l.b16 %v479
          %v704 = vunpack.c.l.b16 %v480
          %v705 = vunpack.c.l.b16 %v481
          %v706 = vunpack.c.l.b16 %v482
          %v707 = vunpack.c.l.b16 %v483
          %v708 = vunpack.c.l.b16 %v484
          %v709 = vunpack.c.l.b16 %v485
          %v710 = vunpack.c.l.b16 %v486
          %v711 = vunpack.c.l.b16 %v487
          %v712 = vunpack.c.l.b16 %v488
          %v713 = vunpack.c.l.b16 %v489
          %v714 = vpack.c.b16 %v699, %v698
          %v715 = vpack.c.b16 %v701, %v700
          %v716 = vpack.c.b16 %v703, %v702
          %v717 = vpack.c.b16 %v705, %v704
          %v718 = vpack.c.b16 %v707, %v706
          %v719 = vpack.c.b16 %v709, %v708
          %v720 = vpack.c.b16 %v711, %v710
          %v721 = vpack.c.b16 %v713, %v712
          %730 = vmatprep.subr.bf16.mxu0 0
          %731 = vmatpush1.bf16.msra.mxu0 %v714
          %732 = vmatprep.subr.bf16.mxu0 0
          %733 = vmatpush1.bf16.msra.mxu0 %v715
          %734 = vmatprep.subr.bf16.mxu0 0
          %735 = vmatpush1.bf16.msra.mxu0 %v716
          %736 = vmatprep.subr.bf16.mxu0 0
          %737 = vmatpush1.bf16.msra.mxu0 %v717
          %738 = vmatprep.subr.bf16.mxu0 0
          %739 = vmatpush1.bf16.msra.mxu0 %v718
          %740 = vmatprep.subr.bf16.mxu0 0
          %741 = vmatpush1.bf16.msra.mxu0 %v719
          %742 = vmatprep.subr.bf16.mxu0 0
          %743 = vmatpush1.bf16.msra.mxu0 %v720
          %744 = vmatprep.subr.bf16.mxu0 0
          %745 = vmatpush1.bf16.msra.mxu0 %v721
          %746 = vmatprep.subr.bf16.mxu0 0
          %747 = vmatpush1.bf16.msra.mxu0 0
          %748 = vmatprep.subr.bf16.mxu0 0
          %749 = vmatpush1.bf16.msra.mxu0 0
          %750 = vmatprep.subr.bf16.mxu0 0
          %751 = vmatpush1.bf16.msra.mxu0 0
          %752 = vmatprep.subr.bf16.mxu0 0
          %753 = vmatpush1.bf16.msra.mxu0 0
          %754 = vmatprep.subr.bf16.mxu0 0
          %755 = vmatpush1.bf16.msra.mxu0 0
          %756 = vmatprep.subr.bf16.mxu0 0
          %757 = vmatpush1.bf16.msra.mxu0 0
          %758 = vmatprep.subr.bf16.mxu0 0
          %759 = vmatpush1.bf16.msra.mxu0 0
          %760 = vmatprep.subr.bf16.mxu0 0
          %761 = vmatpush1.bf16.msra.mxu0 0
          %762 = vmatprep.mubr.bf16.mxu0 0
          %763 = vmatmul.mubr.bf16.gmra.mrb[0].mxu0 %v618
          %v764 = vpop.f32.mrb[0].mxu0
          %v765 = vadd.f32 0.0, %v764
          %v766 = vpop.f32.mrb[0].mxu0
          %v767 = vpop.f32.mrb[0].mxu0
          %v768 = vadd.f32 0.0, %v767
          %v769 = vpop.f32.mrb[0].mxu0
          %770 = vmatprep.mubr.bf16.mxu0 0
          %771 = vmatmul.mubr.bf16.gmra.mrb[0].mxu0 %v619
          %v772 = vpop.f32.mrb[0].mxu0
          %v773 = vadd.f32 0.0, %v772
          %v774 = vpop.f32.mrb[0].mxu0
          %v775 = vpop.f32.mrb[0].mxu0
          %v776 = vadd.f32 0.0, %v775
          %v777 = vpop.f32.mrb[0].mxu0
          %778 = vmatprep.mubr.bf16.mxu0 0
          %779 = vmatmul.mubr.bf16.gmra.mrb[0].mxu0 %v620
          %v780 = vpop.f32.mrb[0].mxu0
          %v781 = vadd.f32 0.0, %v780
          %v782 = vpop.f32.mrb[0].mxu0
          %v783 = vpop.f32.mrb[0].mxu0
          %v784 = vadd.f32 0.0, %v783
          %v785 = vpop.f32.mrb[0].mxu0
          %786 = vmatprep.mubr.bf16.mxu0 0
          %787 = vmatmul.mubr.bf16.gmra.mrb[0].mxu0 %v621
          %v788 = vpop.f32.mrb[0].mxu0
          %v789 = vadd.f32 0.0, %v788
          %v790 = vpop.f32.mrb[0].mxu0
          %v791 = vpop.f32.mrb[0].mxu0
          %v792 = vadd.f32 0.0, %v791
          %v793 = vpop.f32.mrb[0].mxu0
          %794 = vmatprep.mubr.bf16.mxu0 0
          %795 = vmatmul.mubr.bf16.gmra.mrb[0].mxu0 %v622
          %v796 = vpop.f32.mrb[0].mxu0
          %v797 = vadd.f32 0.0, %v796
          %v798 = vpop.f32.mrb[0].mxu0
          %v799 = vpop.f32.mrb[0].mxu0
          %v800 = vadd.f32 0.0, %v799
          %v801 = vpop.f32.mrb[0].mxu0
          %802 = vmatprep.mubr.bf16.mxu0 0
          %803 = vmatmul.mubr.bf16.gmra.mrb[0].mxu0 %v623
          %v804 = vpop.f32.mrb[0].mxu0
          %v805 = vadd.f32 0.0, %v804
          %v806 = vpop.f32.mrb[0].mxu0
          %v807 = vpop.f32.mrb[0].mxu0
          %v808 = vadd.f32 0.0, %v807
          %v809 = vpop.f32.mrb[0].mxu0
          %810 = vmatprep.mubr.bf16.mxu0 0
          %811 = vmatmul.mubr.bf16.gmra.mrb[0].mxu0 %v624
          %v812 = vpop.f32.mrb[0].mxu0
          %v813 = vadd.f32 0.0, %v812
          %v814 = vpop.f32.mrb[0].mxu0
          %v815 = vpop.f32.mrb[0].mxu0
          %v816 = vadd.f32 0.0, %v815
          %v817 = vpop.f32.mrb[0].mxu0
          %818 = vmatprep.mubr.bf16.mxu0 0
          %819 = vmatmul.mubr.bf16.gmra.mrb[0].mxu0 %v625
          %v820 = vpop.f32.mrb[0].mxu0
          %v821 = vadd.f32 0.0, %v820
          %v822 = vpop.f32.mrb[0].mxu0
          %v823 = vpop.f32.mrb[0].mxu0
          %v824 = vadd.f32 0.0, %v823
          %v825 = vpop.f32.mrb[0].mxu0
          %826 = vmatprep.mubr.bf16.mxu0 0
          %827 = vmatmul.mubr.bf16.gmra.mrb[0].mxu0 %v626
          %v828 = vpop.f32.mrb[0].mxu0
          %v829 = vadd.f32 0.0, %v828
          %v830 = vpop.f32.mrb[0].mxu0
          %v831 = vpop.f32.mrb[0].mxu0
          %v832 = vadd.f32 0.0, %v831
          %v833 = vpop.f32.mrb[0].mxu0
          %834 = vmatprep.mubr.bf16.mxu0 0
          %835 = vmatmul.mubr.bf16.gmra.mrb[0].mxu0 %v627
          %v836 = vpop.f32.mrb[0].mxu0
          %v837 = vadd.f32 0.0, %v836
          %v838 = vpop.f32.mrb[0].mxu0
          %v839 = vpop.f32.mrb[0].mxu0
          %v840 = vadd.f32 0.0, %v839
          %v841 = vpop.f32.mrb[0].mxu0
          %842 = vmatprep.mubr.bf16.mxu0 0
          %843 = vmatmul.mubr.bf16.gmra.mrb[0].mxu0 %v628
          %v844 = vpop.f32.mrb[0].mxu0
          %v845 = vadd.f32 0.0, %v844
          %v846 = vpop.f32.mrb[0].mxu0
          %v847 = vpop.f32.mrb[0].mxu0
          %v848 = vadd.f32 0.0, %v847
          %v849 = vpop.f32.mrb[0].mxu0
          %850 = vmatprep.mubr.bf16.mxu0 0
          %851 = vmatmul.mubr.bf16.gmra.mrb[0].mxu0 %v629
          %v852 = vpop.f32.mrb[0].mxu0
          %v853 = vadd.f32 0.0, %v852
          %v854 = vpop.f32.mrb[0].mxu0
          %v855 = vpop.f32.mrb[0].mxu0
          %v856 = vadd.f32 0.0, %v855
          %v857 = vpop.f32.mrb[0].mxu0
          %858 = vmatprep.mubr.bf16.mxu0 0
          %859 = vmatmul.mubr.bf16.gmra.mrb[0].mxu0 %v630
          %v860 = vpop.f32.mrb[0].mxu0
          %v861 = vadd.f32 0.0, %v860
          %v862 = vpop.f32.mrb[0].mxu0
          %v863 = vpop.f32.mrb[0].mxu0
          %v864 = vadd.f32 0.0, %v863
          %v865 = vpop.f32.mrb[0].mxu0
          %866 = vmatprep.mubr.bf16.mxu0 0
          %867 = vmatmul.mubr.bf16.gmra.mrb[0].mxu0 %v631
          %v868 = vpop.f32.mrb[0].mxu0
          %v869 = vadd.f32 0.0, %v868
          %v870 = vpop.f32.mrb[0].mxu0
          %v871 = vpop.f32.mrb[0].mxu0
          %v872 = vadd.f32 0.0, %v871
          %v873 = vpop.f32.mrb[0].mxu0
          %874 = vmatprep.mubr.bf16.mxu0 0
          %875 = vmatmul.mubr.bf16.gmra.mrb[0].mxu0 %v632
          %v876 = vpop.f32.mrb[0].mxu0
          %v877 = vadd.f32 0.0, %v876
          %v878 = vpop.f32.mrb[0].mxu0
          %v879 = vpop.f32.mrb[0].mxu0
          %v880 = vadd.f32 0.0, %v879
          %v881 = vpop.f32.mrb[0].mxu0
          %882 = vmatprep.mubr.bf16.mxu0 0
          %883 = vmatmul.mubr.bf16.gmra.mrb[0].mxu0 %v633
          %v884 = vpop.f32.mrb[0].mxu0
          %v885 = vadd.f32 0.0, %v884
          %v886 = vpop.f32.mrb[0].mxu0
          %v887 = vpop.f32.mrb[0].mxu0
          %v888 = vadd.f32 0.0, %v887
          %v889 = vpop.f32.mrb[0].mxu0
          %890 = vmatprep.mubr.bf16.mxu0 0
          %891 = vmatmul.mubr.bf16.gmra.mrb[0].mxu0 %v634
          %v892 = vpop.f32.mrb[0].mxu0
          %v893 = vadd.f32 0.0, %v892
          %v894 = vpop.f32.mrb[0].mxu0
          %v895 = vpop.f32.mrb[0].mxu0
          %v896 = vadd.f32 0.0, %v895
          %v897 = vpop.f32.mrb[0].mxu0
          %898 = vmatprep.mubr.bf16.mxu0 0
          %899 = vmatmul.mubr.bf16.gmra.mrb[0].mxu0 %v635
          %v900 = vpop.f32.mrb[0].mxu0
          %v901 = vadd.f32 0.0, %v900
          %v902 = vpop.f32.mrb[0].mxu0
          %v903 = vpop.f32.mrb[0].mxu0
          %v904 = vadd.f32 0.0, %v903
          %v905 = vpop.f32.mrb[0].mxu0
          %906 = vmatprep.mubr.bf16.mxu0 0
          %907 = vmatmul.mubr.bf16.gmra.mrb[0].mxu0 %v636
          %v908 = vpop.f32.mrb[0].mxu0
          %v909 = vadd.f32 0.0, %v908
          %v910 = vpop.f32.mrb[0].mxu0
          %v911 = vpop.f32.mrb[0].mxu0
          %v912 = vadd.f32 0.0, %v911
          %v913 = vpop.f32.mrb[0].mxu0
          %914 = vmatprep.mubr.bf16.mxu0 0
          %915 = vmatmul.mubr.bf16.gmra.mrb[0].mxu0 %v637
          %v916 = vpop.f32.mrb[0].mxu0
          %v917 = vadd.f32 0.0, %v916
          %v918 = vpop.f32.mrb[0].mxu0
          %v919 = vpop.f32.mrb[0].mxu0
          %v920 = vadd.f32 0.0, %v919
          %v921 = vpop.f32.mrb[0].mxu0
          %922 = vmatprep.mubr.bf16.mxu0 0
          %923 = vmatmul.mubr.bf16.gmra.mrb[0].mxu0 %v638
          %v924 = vpop.f32.mrb[0].mxu0
          %v925 = vadd.f32 0.0, %v924
          %v926 = vpop.f32.mrb[0].mxu0
          %v927 = vpop.f32.mrb[0].mxu0
          %v928 = vadd.f32 0.0, %v927
          %v929 = vpop.f32.mrb[0].mxu0
          %930 = vmatprep.mubr.bf16.mxu0 0
          %931 = vmatmul.mubr.bf16.gmra.mrb[0].mxu0 %v639
          %v932 = vpop.f32.mrb[0].mxu0
          %v933 = vadd.f32 0.0, %v932
          %v934 = vpop.f32.mrb[0].mxu0
          %v935 = vpop.f32.mrb[0].mxu0
          %v936 = vadd.f32 0.0, %v935
          %v937 = vpop.f32.mrb[0].mxu0
          %938 = vmatprep.mubr.bf16.mxu0 0
          %939 = vmatmul.mubr.bf16.gmra.mrb[0].mxu0 %v640
          %v940 = vpop.f32.mrb[0].mxu0
          %v941 = vadd.f32 0.0, %v940
          %v942 = vpop.f32.mrb[0].mxu0
          %v943 = vpop.f32.mrb[0].mxu0
          %v944 = vadd.f32 0.0, %v943
          %v945 = vpop.f32.mrb[0].mxu0
          %946 = vmatprep.mubr.bf16.mxu0 0
          %947 = vmatmul.mubr.bf16.gmra.mrb[0].mxu0 %v641
          %v948 = vpop.f32.mrb[0].mxu0
          %v949 = vadd.f32 0.0, %v948
          %v950 = vpop.f32.mrb[0].mxu0
          %v951 = vpop.f32.mrb[0].mxu0
          %v952 = vadd.f32 0.0, %v951
          %v953 = vpop.f32.mrb[0].mxu0
          %954 = vmatprep.mubr.bf16.mxu0 0
          %955 = vmatmul.mubr.bf16.gmra.mrb[0].mxu0 %v642
          %v956 = vpop.f32.mrb[0].mxu0
          %v957 = vadd.f32 0.0, %v956
          %v958 = vpop.f32.mrb[0].mxu0
          %v959 = vpop.f32.mrb[0].mxu0
          %v960 = vadd.f32 0.0, %v959
          %v961 = vpop.f32.mrb[0].mxu0
          %962 = vmatprep.mubr.bf16.mxu0 0
          %963 = vmatmul.mubr.bf16.gmra.mrb[0].mxu0 %v643
          %v964 = vpop.f32.mrb[0].mxu0
          %v965 = vadd.f32 0.0, %v964
          %v966 = vpop.f32.mrb[0].mxu0
          %v967 = vpop.f32.mrb[0].mxu0
          %v968 = vadd.f32 0.0, %v967
          %v969 = vpop.f32.mrb[0].mxu0
          %970 = vmatprep.mubr.bf16.mxu0 0
          %971 = vmatmul.mubr.bf16.gmra.mrb[0].mxu0 %v644
          %v972 = vpop.f32.mrb[0].mxu0
          %v973 = vadd.f32 0.0, %v972
          %v974 = vpop.f32.mrb[0].mxu0
          %v975 = vpop.f32.mrb[0].mxu0
          %v976 = vadd.f32 0.0, %v975
          %v977 = vpop.f32.mrb[0].mxu0
          %978 = vmatprep.mubr.bf16.mxu0 0
          %979 = vmatmul.mubr.bf16.gmra.mrb[0].mxu0 %v645
          %v980 = vpop.f32.mrb[0].mxu0
          %v981 = vadd.f32 0.0, %v980
          %v982 = vpop.f32.mrb[0].mxu0
          %v983 = vpop.f32.mrb[0].mxu0
          %v984 = vadd.f32 0.0, %v983
          %v985 = vpop.f32.mrb[0].mxu0
          %986 = vmatprep.mubr.bf16.mxu0 0
          %987 = vmatmul.mubr.bf16.gmra.mrb[0].mxu0 %v646
          %v988 = vpop.f32.mrb[0].mxu0
          %v989 = vadd.f32 0.0, %v988
          %v990 = vpop.f32.mrb[0].mxu0
          %v991 = vpop.f32.mrb[0].mxu0
          %v992 = vadd.f32 0.0, %v991
          %v993 = vpop.f32.mrb[0].mxu0
          %994 = vmatprep.mubr.bf16.mxu0 0
          %995 = vmatmul.mubr.bf16.gmra.mrb[0].mxu0 %v647
          %v996 = vpop.f32.mrb[0].mxu0
          %v997 = vadd.f32 0.0, %v996
          %v998 = vpop.f32.mrb[0].mxu0
          %v999 = vpop.f32.mrb[0].mxu0
          %v1000 = vadd.f32 0.0, %v999
          %v1001 = vpop.f32.mrb[0].mxu0
          %1002 = vmatprep.mubr.bf16.mxu0 0
          %1003 = vmatmul.mubr.bf16.gmra.mrb[0].mxu0 %v648
          %v1004 = vpop.f32.mrb[0].mxu0
          %v1005 = vadd.f32 0.0, %v1004
          %v1006 = vpop.f32.mrb[0].mxu0
          %v1007 = vpop.f32.mrb[0].mxu0
          %v1008 = vadd.f32 0.0, %v1007
          %v1009 = vpop.f32.mrb[0].mxu0
          %1010 = vmatprep.mubr.bf16.mxu0 0
          %1011 = vmatmul.mubr.bf16.gmra.mrb[0].mxu0 %v649
          %v1012 = vpop.f32.mrb[0].mxu0
          %v1013 = vadd.f32 0.0, %v1012
          %v1014 = vpop.f32.mrb[0].mxu0
          %v1015 = vpop.f32.mrb[0].mxu0
          %v1016 = vadd.f32 0.0, %v1015
          %v1017 = vpop.f32.mrb[0].mxu0
          %1018 = vdwg.mxu0
          %v1019 = vpack.c.bf16 %v768, %v765
          %v1020 = vpack.c.bf16 %v776, %v773
          %v1021 = vpack.c.bf16 %v784, %v781
          %v1022 = vpack.c.bf16 %v792, %v789
          %v1023 = vpack.c.bf16 %v800, %v797
          %v1024 = vpack.c.bf16 %v808, %v805
          %v1025 = vpack.c.bf16 %v816, %v813
          %v1026 = vpack.c.bf16 %v824, %v821
          %v1027 = vpack.c.bf16 %v832, %v829
          %v1028 = vpack.c.bf16 %v840, %v837
          %v1029 = vpack.c.bf16 %v848, %v845
          %v1030 = vpack.c.bf16 %v856, %v853
          %v1031 = vpack.c.bf16 %v864, %v861
          %v1032 = vpack.c.bf16 %v872, %v869
          %v1033 = vpack.c.bf16 %v880, %v877
          %v1034 = vpack.c.bf16 %v888, %v885
          %v1035 = vpack.c.bf16 %v896, %v893
          %v1036 = vpack.c.bf16 %v904, %v901
          %v1037 = vpack.c.bf16 %v912, %v909
          %v1038 = vpack.c.bf16 %v920, %v917
          %v1039 = vpack.c.bf16 %v928, %v925
          %v1040 = vpack.c.bf16 %v936, %v933
          %v1041 = vpack.c.bf16 %v944, %v941
          %v1042 = vpack.c.bf16 %v952, %v949
          %v1043 = vpack.c.bf16 %v960, %v957
          %v1044 = vpack.c.bf16 %v968, %v965
          %v1045 = vpack.c.bf16 %v976, %v973
          %v1046 = vpack.c.bf16 %v984, %v981
          %v1047 = vpack.c.bf16 %v992, %v989
          %v1048 = vpack.c.bf16 %v1000, %v997
          %v1049 = vpack.c.bf16 %v1008, %v1005
          %v1050 = vpack.c.bf16 %v1016, %v1013
          %v1051 = vld [vmem:[#allocation2] sm:$0xff]
          %v1052 = vld [vmem:[#allocation2 + $0x8] sm:$0xff]
          %v1053 = vld [vmem:[#allocation2 + $0x10] sm:$0xff]
          %v1054 = vld [vmem:[#allocation2 + $0x18] sm:$0xff]
          %v1055 = vld [vmem:[#allocation2 + $0x20] sm:$0xff]
          %v1056 = vld [vmem:[#allocation2 + $0x28] sm:$0xff]
          %v1057 = vld [vmem:[#allocation2 + $0x30] sm:$0xff]
          %v1058 = vld [vmem:[#allocation2 + $0x38] sm:$0xff]
          %v1059 = vld [vmem:[#allocation2 + $0x40] sm:$0xff]
          %v1060 = vld [vmem:[#allocation2 + $0x48] sm:$0xff]
          %v1061 = vld [vmem:[#allocation2 + $0x50] sm:$0xff]
          %v1062 = vld [vmem:[#allocation2 + $0x58] sm:$0xff]
          %v1063 = vld [vmem:[#allocation2 + $0x60] sm:$0xff]
          %v1064 = vld [vmem:[#allocation2 + $0x68] sm:$0xff]
          %v1065 = vld [vmem:[#allocation2 + $0x70] sm:$0xff]
          %v1066 = vld [vmem:[#allocation2 + $0x78] sm:$0xff]
          %v1067 = vld [vmem:[#allocation2 + $0x80] sm:$0xff]
          %v1068 = vld [vmem:[#allocation2 + $0x88] sm:$0xff]
          %v1069 = vld [vmem:[#allocation2 + $0x90] sm:$0xff]
          %v1070 = vld [vmem:[#allocation2 + $0x98] sm:$0xff]
          %v1071 = vld [vmem:[#allocation2 + $0xa0] sm:$0xff]
          %v1072 = vld [vmem:[#allocation2 + $0xa8] sm:$0xff]
          %v1073 = vld [vmem:[#allocation2 + $0xb0] sm:$0xff]
          %v1074 = vld [vmem:[#allocation2 + $0xb8] sm:$0xff]
          %v1075 = vld [vmem:[#allocation2 + $0xc0] sm:$0xff]
          %v1076 = vld [vmem:[#allocation2 + $0xc8] sm:$0xff]
          %v1077 = vld [vmem:[#allocation2 + $0xd0] sm:$0xff]
          %v1078 = vld [vmem:[#allocation2 + $0xd8] sm:$0xff]
          %v1079 = vld [vmem:[#allocation2 + $0xe0] sm:$0xff]
          %v1080 = vld [vmem:[#allocation2 + $0xe8] sm:$0xff]
          %v1081 = vld [vmem:[#allocation2 + $0xf0] sm:$0xff]
          %v1082 = vld [vmem:[#allocation2 + $0xf8] sm:$0xff]
          %v1083 = vld [vmem:[#allocation2 + $0x100] sm:$0xff]
          %v1084 = vld [vmem:[#allocation2 + $0x108] sm:$0xff]
          %v1085 = vld [vmem:[#allocation2 + $0x110] sm:$0xff]
          %v1086 = vld [vmem:[#allocation2 + $0x118] sm:$0xff]
          %v1087 = vld [vmem:[#allocation2 + $0x120] sm:$0xff]
          %v1088 = vld [vmem:[#allocation2 + $0x128] sm:$0xff]
          %v1089 = vld [vmem:[#allocation2 + $0x130] sm:$0xff]
          %v1090 = vld [vmem:[#allocation2 + $0x138] sm:$0xff]
          %v1091 = vld [vmem:[#allocation2 + $0x140] sm:$0xff]
          %v1092 = vld [vmem:[#allocation2 + $0x148] sm:$0xff]
          %v1093 = vld [vmem:[#allocation2 + $0x150] sm:$0xff]
          %v1094 = vld [vmem:[#allocation2 + $0x158] sm:$0xff]
          %v1095 = vld [vmem:[#allocation2 + $0x160] sm:$0xff]
          %v1096 = vld [vmem:[#allocation2 + $0x168] sm:$0xff]
          %v1097 = vld [vmem:[#allocation2 + $0x170] sm:$0xff]
          %v1098 = vld [vmem:[#allocation2 + $0x178] sm:$0xff]
          %v1099 = vld [vmem:[#allocation2 + $0x180] sm:$0xff]
          %v1100 = vld [vmem:[#allocation2 + $0x188] sm:$0xff]
          %v1101 = vld [vmem:[#allocation2 + $0x190] sm:$0xff]
          %v1102 = vld [vmem:[#allocation2 + $0x198] sm:$0xff]
          %v1103 = vld [vmem:[#allocation2 + $0x1a0] sm:$0xff]
          %v1104 = vld [vmem:[#allocation2 + $0x1a8] sm:$0xff]
          %v1105 = vld [vmem:[#allocation2 + $0x1b0] sm:$0xff]
          %v1106 = vld [vmem:[#allocation2 + $0x1b8] sm:$0xff]
          %v1107 = vld [vmem:[#allocation2 + $0x1c0] sm:$0xff]
          %v1108 = vld [vmem:[#allocation2 + $0x1c8] sm:$0xff]
          %v1109 = vld [vmem:[#allocation2 + $0x1d0] sm:$0xff]
          %v1110 = vld [vmem:[#allocation2 + $0x1d8] sm:$0xff]
          %v1111 = vld [vmem:[#allocation2 + $0x1e0] sm:$0xff]
          %v1112 = vld [vmem:[#allocation2 + $0x1e8] sm:$0xff]
          %v1113 = vld [vmem:[#allocation2 + $0x1f0] sm:$0xff]
          %v1114 = vld [vmem:[#allocation2 + $0x1f8] sm:$0xff]
          %v1115 = vld [vmem:[%s279] sm:$0xff]
          %v1116 = vld [vmem:[%s279 + $0x8] sm:$0xff]
          %v1117 = vld [vmem:[%s279 + $0x10] sm:$0xff]
          %v1118 = vld [vmem:[%s279 + $0x18] sm:$0xff]
          %v1119 = vld [vmem:[%s279 + $0x20] sm:$0xff]
          %v1120 = vld [vmem:[%s279 + $0x28] sm:$0xff]
          %v1121 = vld [vmem:[%s279 + $0x30] sm:$0xff]
          %v1122 = vld [vmem:[%s279 + $0x38] sm:$0xff]
          %v1123 = vld [vmem:[%s279 + $0x40] sm:$0xff]
          %v1124 = vld [vmem:[%s279 + $0x48] sm:$0xff]
          %v1125 = vld [vmem:[%s279 + $0x50] sm:$0xff]
          %v1126 = vld [vmem:[%s279 + $0x58] sm:$0xff]
          %v1127 = vld [vmem:[%s279 + $0x60] sm:$0xff]
          %v1128 = vld [vmem:[%s279 + $0x68] sm:$0xff]
          %v1129 = vld [vmem:[%s279 + $0x70] sm:$0xff]
          %v1130 = vld [vmem:[%s279 + $0x78] sm:$0xff]
          %v1131 = vld [vmem:[%s279 + $0x80] sm:$0xff]
          %v1132 = vld [vmem:[%s279 + $0x88] sm:$0xff]
          %v1133 = vld [vmem:[%s279 + $0x90] sm:$0xff]
          %v1134 = vld [vmem:[%s279 + $0x98] sm:$0xff]
          %v1135 = vld [vmem:[%s279 + $0xa0] sm:$0xff]
          %v1136 = vld [vmem:[%s279 + $0xa8] sm:$0xff]
          %v1137 = vld [vmem:[%s279 + $0xb0] sm:$0xff]
          %v1138 = vld [vmem:[%s279 + $0xb8] sm:$0xff]
          %v1139 = vld [vmem:[%s279 + $0xc0] sm:$0xff]
          %v1140 = vld [vmem:[%s279 + $0xc8] sm:$0xff]
          %v1141 = vld [vmem:[%s279 + $0xd0] sm:$0xff]
          %v1142 = vld [vmem:[%s279 + $0xd8] sm:$0xff]
          %v1143 = vld [vmem:[%s279 + $0xe0] sm:$0xff]
          %v1144 = vld [vmem:[%s279 + $0xe8] sm:$0xff]
          %v1145 = vld [vmem:[%s279 + $0xf0] sm:$0xff]
          %v1146 = vld [vmem:[%s279 + $0xf8] sm:$0xff]
          %v1147 = vld [vmem:[%s279 + $0x100] sm:$0xff]
          %v1148 = vld [vmem:[%s279 + $0x108] sm:$0xff]
          %v1149 = vld [vmem:[%s279 + $0x110] sm:$0xff]
          %v1150 = vld [vmem:[%s279 + $0x118] sm:$0xff]
          %v1151 = vld [vmem:[%s279 + $0x120] sm:$0xff]
          %v1152 = vld [vmem:[%s279 + $0x128] sm:$0xff]
          %v1153 = vld [vmem:[%s279 + $0x130] sm:$0xff]
          %v1154 = vld [vmem:[%s279 + $0x138] sm:$0xff]
          %v1155 = vld [vmem:[%s279 + $0x140] sm:$0xff]
          %v1156 = vld [vmem:[%s279 + $0x148] sm:$0xff]
          %v1157 = vld [vmem:[%s279 + $0x150] sm:$0xff]
          %v1158 = vld [vmem:[%s279 + $0x158] sm:$0xff]
          %v1159 = vld [vmem:[%s279 + $0x160] sm:$0xff]
          %v1160 = vld [vmem:[%s279 + $0x168] sm:$0xff]
          %v1161 = vld [vmem:[%s279 + $0x170] sm:$0xff]
          %v1162 = vld [vmem:[%s279 + $0x178] sm:$0xff]
          %v1163 = vld [vmem:[%s279 + $0x180] sm:$0xff]
          %v1164 = vld [vmem:[%s279 + $0x188] sm:$0xff]
          %v1165 = vld [vmem:[%s279 + $0x190] sm:$0xff]
          %v1166 = vld [vmem:[%s279 + $0x198] sm:$0xff]
          %v1167 = vld [vmem:[%s279 + $0x1a0] sm:$0xff]
          %v1168 = vld [vmem:[%s279 + $0x1a8] sm:$0xff]
          %v1169 = vld [vmem:[%s279 + $0x1b0] sm:$0xff]
          %v1170 = vld [vmem:[%s279 + $0x1b8] sm:$0xff]
          %v1171 = vld [vmem:[%s279 + $0x1c0] sm:$0xff]
          %v1172 = vld [vmem:[%s279 + $0x1c8] sm:$0xff]
          %v1173 = vld [vmem:[%s279 + $0x1d0] sm:$0xff]
          %v1174 = vld [vmem:[%s279 + $0x1d8] sm:$0xff]
          %v1175 = vld [vmem:[%s279 + $0x1e0] sm:$0xff]
          %v1176 = vld [vmem:[%s279 + $0x1e8] sm:$0xff]
          %v1177 = vld [vmem:[%s279 + $0x1f0] sm:$0xff]
          %v1178 = vld [vmem:[%s279 + $0x1f8] sm:$0xff]
          %v1179 = vld [vmem:[%s279 + $0x200] sm:$0xff]
          %v1180 = vld [vmem:[%s279 + $0x208] sm:$0xff]
          %v1181 = vld [vmem:[%s279 + $0x210] sm:$0xff]
          %v1182 = vld [vmem:[%s279 + $0x218] sm:$0xff]
          %v1183 = vld [vmem:[%s279 + $0x220] sm:$0xff]
          %v1184 = vld [vmem:[%s279 + $0x228] sm:$0xff]
          %v1185 = vld [vmem:[%s279 + $0x230] sm:$0xff]
          %v1186 = vld [vmem:[%s279 + $0x238] sm:$0xff]
          %v1187 = vld [vmem:[%s279 + $0x240] sm:$0xff]
          %v1188 = vld [vmem:[%s279 + $0x248] sm:$0xff]
          %v1189 = vld [vmem:[%s279 + $0x250] sm:$0xff]
          %v1190 = vld [vmem:[%s279 + $0x258] sm:$0xff]
          %v1191 = vld [vmem:[%s279 + $0x260] sm:$0xff]
          %v1192 = vld [vmem:[%s279 + $0x268] sm:$0xff]
          %v1193 = vld [vmem:[%s279 + $0x270] sm:$0xff]
          %v1194 = vld [vmem:[%s279 + $0x278] sm:$0xff]
          %v1195 = vld [vmem:[%s279 + $0x280] sm:$0xff]
          %v1196 = vld [vmem:[%s279 + $0x288] sm:$0xff]
          %v1197 = vld [vmem:[%s279 + $0x290] sm:$0xff]
          %v1198 = vld [vmem:[%s279 + $0x298] sm:$0xff]
          %v1199 = vld [vmem:[%s279 + $0x2a0] sm:$0xff]
          %v1200 = vld [vmem:[%s279 + $0x2a8] sm:$0xff]
          %v1201 = vld [vmem:[%s279 + $0x2b0] sm:$0xff]
          %v1202 = vld [vmem:[%s279 + $0x2b8] sm:$0xff]
          %v1203 = vld [vmem:[%s279 + $0x2c0] sm:$0xff]
          %v1204 = vld [vmem:[%s279 + $0x2c8] sm:$0xff]
          %v1205 = vld [vmem:[%s279 + $0x2d0] sm:$0xff]
          %v1206 = vld [vmem:[%s279 + $0x2d8] sm:$0xff]
          %v1207 = vld [vmem:[%s279 + $0x2e0] sm:$0xff]
          %v1208 = vld [vmem:[%s279 + $0x2e8] sm:$0xff]
          %v1209 = vld [vmem:[%s279 + $0x2f0] sm:$0xff]
          %v1210 = vld [vmem:[%s279 + $0x2f8] sm:$0xff]
          %v1211 = vld [vmem:[%s279 + $0x300] sm:$0xff]
          %v1212 = vld [vmem:[%s279 + $0x308] sm:$0xff]
          %v1213 = vld [vmem:[%s279 + $0x310] sm:$0xff]
          %v1214 = vld [vmem:[%s279 + $0x318] sm:$0xff]
          %v1215 = vld [vmem:[%s279 + $0x320] sm:$0xff]
          %v1216 = vld [vmem:[%s279 + $0x328] sm:$0xff]
          %v1217 = vld [vmem:[%s279 + $0x330] sm:$0xff]
          %v1218 = vld [vmem:[%s279 + $0x338] sm:$0xff]
          %v1219 = vld [vmem:[%s279 + $0x340] sm:$0xff]
          %v1220 = vld [vmem:[%s279 + $0x348] sm:$0xff]
          %v1221 = vld [vmem:[%s279 + $0x350] sm:$0xff]
          %v1222 = vld [vmem:[%s279 + $0x358] sm:$0xff]
          %v1223 = vld [vmem:[%s279 + $0x360] sm:$0xff]
          %v1224 = vld [vmem:[%s279 + $0x368] sm:$0xff]
          %v1225 = vld [vmem:[%s279 + $0x370] sm:$0xff]
          %v1226 = vld [vmem:[%s279 + $0x378] sm:$0xff]
          %v1227 = vld [vmem:[%s279 + $0x380] sm:$0xff]
          %v1228 = vld [vmem:[%s279 + $0x388] sm:$0xff]
          %v1229 = vld [vmem:[%s279 + $0x390] sm:$0xff]
          %v1230 = vld [vmem:[%s279 + $0x398] sm:$0xff]
          %v1231 = vld [vmem:[%s279 + $0x3a0] sm:$0xff]
          %v1232 = vld [vmem:[%s279 + $0x3a8] sm:$0xff]
          %v1233 = vld [vmem:[%s279 + $0x3b0] sm:$0xff]
          %v1234 = vld [vmem:[%s279 + $0x3b8] sm:$0xff]
          %v1235 = vld [vmem:[%s279 + $0x3c0] sm:$0xff]
          %v1236 = vld [vmem:[%s279 + $0x3c8] sm:$0xff]
          %v1237 = vld [vmem:[%s279 + $0x3d0] sm:$0xff]
          %v1238 = vld [vmem:[%s279 + $0x3d8] sm:$0xff]
          %v1239 = vld [vmem:[%s279 + $0x3e0] sm:$0xff]
          %v1240 = vld [vmem:[%s279 + $0x3e8] sm:$0xff]
          %v1241 = vld [vmem:[%s279 + $0x3f0] sm:$0xff]
          %v1242 = vld [vmem:[%s279 + $0x3f8] sm:$0xff]
          %v1371 = vunpack.c.l.b16 %v1115
          %v1372 = vunpack.c.h.b16 %v1115
          %v1373 = vunpack.c.l.b16 %v1116
          %v1374 = vunpack.c.h.b16 %v1116
          %v1375 = vunpack.c.l.b16 %v1117
          %v1376 = vunpack.c.h.b16 %v1117
          %v1377 = vunpack.c.l.b16 %v1118
          %v1378 = vunpack.c.h.b16 %v1118
          %v1379 = vunpack.c.l.b16 %v1119
          %v1380 = vunpack.c.h.b16 %v1119
          %v1381 = vunpack.c.l.b16 %v1120
          %v1382 = vunpack.c.h.b16 %v1120
          %v1383 = vunpack.c.l.b16 %v1121
          %v1384 = vunpack.c.h.b16 %v1121
          %v1385 = vunpack.c.l.b16 %v1122
          %v1386 = vunpack.c.h.b16 %v1122
          %v1387 = vunpack.c.l.b16 %v1123
          %v1388 = vunpack.c.h.b16 %v1123
          %v1389 = vunpack.c.l.b16 %v1124
          %v1390 = vunpack.c.h.b16 %v1124
          %v1391 = vunpack.c.l.b16 %v1125
          %v1392 = vunpack.c.h.b16 %v1125
          %v1393 = vunpack.c.l.b16 %v1126
          %v1394 = vunpack.c.h.b16 %v1126
          %v1395 = vunpack.c.l.b16 %v1127
          %v1396 = vunpack.c.h.b16 %v1127
          %v1397 = vunpack.c.l.b16 %v1128
          %v1398 = vunpack.c.h.b16 %v1128
          %v1399 = vunpack.c.l.b16 %v1129
          %v1400 = vunpack.c.h.b16 %v1129
          %v1401 = vunpack.c.l.b16 %v1130
          %v1402 = vunpack.c.h.b16 %v1130
          %v1403 = vunpack.c.l.b16 %v1131
          %v1404 = vunpack.c.h.b16 %v1131
          %v1405 = vunpack.c.l.b16 %v1132
          %v1406 = vunpack.c.h.b16 %v1132
          %v1407 = vunpack.c.l.b16 %v1133
          %v1408 = vunpack.c.h.b16 %v1133
          %v1409 = vunpack.c.l.b16 %v1134
          %v1410 = vunpack.c.h.b16 %v1134
          %v1411 = vunpack.c.l.b16 %v1135
          %v1412 = vunpack.c.h.b16 %v1135
          %v1413 = vunpack.c.l.b16 %v1136
          %v1414 = vunpack.c.h.b16 %v1136
          %v1415 = vunpack.c.l.b16 %v1137
          %v1416 = vunpack.c.h.b16 %v1137
          %v1417 = vunpack.c.l.b16 %v1138
          %v1418 = vunpack.c.h.b16 %v1138
          %v1419 = vunpack.c.l.b16 %v1139
          %v1420 = vunpack.c.h.b16 %v1139
          %v1421 = vunpack.c.l.b16 %v1140
          %v1422 = vunpack.c.h.b16 %v1140
          %v1423 = vunpack.c.l.b16 %v1141
          %v1424 = vunpack.c.h.b16 %v1141
          %v1425 = vunpack.c.l.b16 %v1142
          %v1426 = vunpack.c.h.b16 %v1142
          %v1427 = vunpack.c.l.b16 %v1143
          %v1428 = vunpack.c.h.b16 %v1143
          %v1429 = vunpack.c.l.b16 %v1144
          %v1430 = vunpack.c.h.b16 %v1144
          %v1431 = vunpack.c.l.b16 %v1145
          %v1432 = vunpack.c.h.b16 %v1145
          %v1433 = vunpack.c.l.b16 %v1146
          %v1434 = vunpack.c.h.b16 %v1146
          %v1435 = vunpack.c.l.b16 %v1147
          %v1436 = vunpack.c.h.b16 %v1147
          %v1437 = vunpack.c.l.b16 %v1148
          %v1438 = vunpack.c.h.b16 %v1148
          %v1439 = vunpack.c.l.b16 %v1149
          %v1440 = vunpack.c.h.b16 %v1149
          %v1441 = vunpack.c.l.b16 %v1150
          %v1442 = vunpack.c.h.b16 %v1150
          %v1443 = vunpack.c.l.b16 %v1151
          %v1444 = vunpack.c.h.b16 %v1151
          %v1445 = vunpack.c.l.b16 %v1152
          %v1446 = vunpack.c.h.b16 %v1152
          %v1447 = vunpack.c.l.b16 %v1153
          %v1448 = vunpack.c.h.b16 %v1153
          %v1449 = vunpack.c.l.b16 %v1154
          %v1450 = vunpack.c.h.b16 %v1154
          %v1451 = vunpack.c.l.b16 %v1155
          %v1452 = vunpack.c.h.b16 %v1155
          %v1453 = vunpack.c.l.b16 %v1156
          %v1454 = vunpack.c.h.b16 %v1156
          %v1455 = vunpack.c.l.b16 %v1157
          %v1456 = vunpack.c.h.b16 %v1157
          %v1457 = vunpack.c.l.b16 %v1158
          %v1458 = vunpack.c.h.b16 %v1158
          %v1459 = vunpack.c.l.b16 %v1159
          %v1460 = vunpack.c.h.b16 %v1159
          %v1461 = vunpack.c.l.b16 %v1160
          %v1462 = vunpack.c.h.b16 %v1160
          %v1463 = vunpack.c.l.b16 %v1161
          %v1464 = vunpack.c.h.b16 %v1161
          %v1465 = vunpack.c.l.b16 %v1162
          %v1466 = vunpack.c.h.b16 %v1162
          %v1467 = vunpack.c.l.b16 %v1163
          %v1468 = vunpack.c.h.b16 %v1163
          %v1469 = vunpack.c.l.b16 %v1164
          %v1470 = vunpack.c.h.b16 %v1164
          %v1471 = vunpack.c.l.b16 %v1165
          %v1472 = vunpack.c.h.b16 %v1165
          %v1473 = vunpack.c.l.b16 %v1166
          %v1474 = vunpack.c.h.b16 %v1166
          %v1475 = vunpack.c.l.b16 %v1167
          %v1476 = vunpack.c.h.b16 %v1167
          %v1477 = vunpack.c.l.b16 %v1168
          %v1478 = vunpack.c.h.b16 %v1168
          %v1479 = vunpack.c.l.b16 %v1169
          %v1480 = vunpack.c.h.b16 %v1169
          %v1481 = vunpack.c.l.b16 %v1170
          %v1482 = vunpack.c.h.b16 %v1170
          %v1483 = vunpack.c.l.b16 %v1171
          %v1484 = vunpack.c.h.b16 %v1171
          %v1485 = vunpack.c.l.b16 %v1172
          %v1486 = vunpack.c.h.b16 %v1172
          %v1487 = vunpack.c.l.b16 %v1173
          %v1488 = vunpack.c.h.b16 %v1173
          %v1489 = vunpack.c.l.b16 %v1174
          %v1490 = vunpack.c.h.b16 %v1174
          %v1491 = vunpack.c.l.b16 %v1175
          %v1492 = vunpack.c.h.b16 %v1175
          %v1493 = vunpack.c.l.b16 %v1176
          %v1494 = vunpack.c.h.b16 %v1176
          %v1495 = vunpack.c.l.b16 %v1177
          %v1496 = vunpack.c.h.b16 %v1177
          %v1497 = vunpack.c.l.b16 %v1178
          %v1498 = vunpack.c.h.b16 %v1178
          %v1499 = vunpack.c.l.b16 %v1179
          %v1500 = vunpack.c.h.b16 %v1179
          %v1501 = vunpack.c.l.b16 %v1180
          %v1502 = vunpack.c.h.b16 %v1180
          %v1503 = vunpack.c.l.b16 %v1181
          %v1504 = vunpack.c.h.b16 %v1181
          %v1505 = vunpack.c.l.b16 %v1182
          %v1506 = vunpack.c.h.b16 %v1182
          %v1507 = vunpack.c.l.b16 %v1183
          %v1508 = vunpack.c.h.b16 %v1183
          %v1509 = vunpack.c.l.b16 %v1184
          %v1510 = vunpack.c.h.b16 %v1184
          %v1511 = vunpack.c.l.b16 %v1185
          %v1512 = vunpack.c.h.b16 %v1185
          %v1513 = vunpack.c.l.b16 %v1186
          %v1514 = vunpack.c.h.b16 %v1186
          %v1515 = vunpack.c.l.b16 %v1187
          %v1516 = vunpack.c.h.b16 %v1187
          %v1517 = vunpack.c.l.b16 %v1188
          %v1518 = vunpack.c.h.b16 %v1188
          %v1519 = vunpack.c.l.b16 %v1189
          %v1520 = vunpack.c.h.b16 %v1189
          %v1521 = vunpack.c.l.b16 %v1190
          %v1522 = vunpack.c.h.b16 %v1190
          %v1523 = vunpack.c.l.b16 %v1191
          %v1524 = vunpack.c.h.b16 %v1191
          %v1525 = vunpack.c.l.b16 %v1192
          %v1526 = vunpack.c.h.b16 %v1192
          %v1527 = vunpack.c.l.b16 %v1193
          %v1528 = vunpack.c.h.b16 %v1193
          %v1529 = vunpack.c.l.b16 %v1194
          %v1530 = vunpack.c.h.b16 %v1194
          %v1531 = vunpack.c.l.b16 %v1195
          %v1532 = vunpack.c.h.b16 %v1195
          %v1533 = vunpack.c.l.b16 %v1196
          %v1534 = vunpack.c.h.b16 %v1196
          %v1535 = vunpack.c.l.b16 %v1197
          %v1536 = vunpack.c.h.b16 %v1197
          %v1537 = vunpack.c.l.b16 %v1198
          %v1538 = vunpack.c.h.b16 %v1198
          %v1539 = vunpack.c.l.b16 %v1199
          %v1540 = vunpack.c.h.b16 %v1199
          %v1541 = vunpack.c.l.b16 %v1200
          %v1542 = vunpack.c.h.b16 %v1200
          %v1543 = vunpack.c.l.b16 %v1201
          %v1544 = vunpack.c.h.b16 %v1201
          %v1545 = vunpack.c.l.b16 %v1202
          %v1546 = vunpack.c.h.b16 %v1202
          %v1547 = vunpack.c.l.b16 %v1203
          %v1548 = vunpack.c.h.b16 %v1203
          %v1549 = vunpack.c.l.b16 %v1204
          %v1550 = vunpack.c.h.b16 %v1204
          %v1551 = vunpack.c.l.b16 %v1205
          %v1552 = vunpack.c.h.b16 %v1205
          %v1553 = vunpack.c.l.b16 %v1206
          %v1554 = vunpack.c.h.b16 %v1206
          %v1555 = vunpack.c.l.b16 %v1207
          %v1556 = vunpack.c.h.b16 %v1207
          %v1557 = vunpack.c.l.b16 %v1208
          %v1558 = vunpack.c.h.b16 %v1208
          %v1559 = vunpack.c.l.b16 %v1209
          %v1560 = vunpack.c.h.b16 %v1209
          %v1561 = vunpack.c.l.b16 %v1210
          %v1562 = vunpack.c.h.b16 %v1210
          %v1563 = vunpack.c.l.b16 %v1211
          %v1564 = vunpack.c.h.b16 %v1211
          %v1565 = vunpack.c.l.b16 %v1212
          %v1566 = vunpack.c.h.b16 %v1212
          %v1567 = vunpack.c.l.b16 %v1213
          %v1568 = vunpack.c.h.b16 %v1213
          %v1569 = vunpack.c.l.b16 %v1214
          %v1570 = vunpack.c.h.b16 %v1214
          %v1571 = vunpack.c.l.b16 %v1215
          %v1572 = vunpack.c.h.b16 %v1215
          %v1573 = vunpack.c.l.b16 %v1216
          %v1574 = vunpack.c.h.b16 %v1216
          %v1575 = vunpack.c.l.b16 %v1217
          %v1576 = vunpack.c.h.b16 %v1217
          %v1577 = vunpack.c.l.b16 %v1218
          %v1578 = vunpack.c.h.b16 %v1218
          %v1579 = vunpack.c.l.b16 %v1219
          %v1580 = vunpack.c.h.b16 %v1219
          %v1581 = vunpack.c.l.b16 %v1220
          %v1582 = vunpack.c.h.b16 %v1220
          %v1583 = vunpack.c.l.b16 %v1221
          %v1584 = vunpack.c.h.b16 %v1221
          %v1585 = vunpack.c.l.b16 %v1222
          %v1586 = vunpack.c.h.b16 %v1222
          %v1587 = vunpack.c.l.b16 %v1223
          %v1588 = vunpack.c.h.b16 %v1223
          %v1589 = vunpack.c.l.b16 %v1224
          %v1590 = vunpack.c.h.b16 %v1224
          %v1591 = vunpack.c.l.b16 %v1225
          %v1592 = vunpack.c.h.b16 %v1225
          %v1593 = vunpack.c.l.b16 %v1226
          %v1594 = vunpack.c.h.b16 %v1226
          %v1595 = vunpack.c.l.b16 %v1227
          %v1596 = vunpack.c.h.b16 %v1227
          %v1597 = vunpack.c.l.b16 %v1228
          %v1598 = vunpack.c.h.b16 %v1228
          %v1599 = vunpack.c.l.b16 %v1229
          %v1600 = vunpack.c.h.b16 %v1229
          %v1601 = vunpack.c.l.b16 %v1230
          %v1602 = vunpack.c.h.b16 %v1230
          %v1603 = vunpack.c.l.b16 %v1231
          %v1604 = vunpack.c.h.b16 %v1231
          %v1605 = vunpack.c.l.b16 %v1232
          %v1606 = vunpack.c.h.b16 %v1232
          %v1607 = vunpack.c.l.b16 %v1233
          %v1608 = vunpack.c.h.b16 %v1233
          %v1609 = vunpack.c.l.b16 %v1234
          %v1610 = vunpack.c.h.b16 %v1234
          %v1611 = vunpack.c.l.b16 %v1235
          %v1612 = vunpack.c.h.b16 %v1235
          %v1613 = vunpack.c.l.b16 %v1236
          %v1614 = vunpack.c.h.b16 %v1236
          %v1615 = vunpack.c.l.b16 %v1237
          %v1616 = vunpack.c.h.b16 %v1237
          %v1617 = vunpack.c.l.b16 %v1238
          %v1618 = vunpack.c.h.b16 %v1238
          %v1619 = vunpack.c.l.b16 %v1239
          %v1620 = vunpack.c.h.b16 %v1239
          %v1621 = vunpack.c.l.b16 %v1240
          %v1622 = vunpack.c.h.b16 %v1240
          %v1623 = vunpack.c.l.b16 %v1241
          %v1624 = vunpack.c.h.b16 %v1241
          %v1625 = vunpack.c.l.b16 %v1242
          %v1626 = vunpack.c.h.b16 %v1242
          %v1627 = vpack.c.b16 %v1375, %v1371
          %v1628 = vpack.c.b16 %v1376, %v1372
          %v1629 = vpack.c.b16 %v1377, %v1373
          %v1630 = vpack.c.b16 %v1378, %v1374
          %v1631 = vpack.c.b16 %v1383, %v1379
          %v1632 = vpack.c.b16 %v1384, %v1380
          %v1633 = vpack.c.b16 %v1385, %v1381
          %v1634 = vpack.c.b16 %v1386, %v1382
          %v1635 = vpack.c.b16 %v1391, %v1387
          %v1636 = vpack.c.b16 %v1392, %v1388
          %v1637 = vpack.c.b16 %v1393, %v1389
          %v1638 = vpack.c.b16 %v1394, %v1390
          %v1639 = vpack.c.b16 %v1399, %v1395
          %v1640 = vpack.c.b16 %v1400, %v1396
          %v1641 = vpack.c.b16 %v1401, %v1397
          %v1642 = vpack.c.b16 %v1402, %v1398
          %v1643 = vpack.c.b16 %v1407, %v1403
          %v1644 = vpack.c.b16 %v1408, %v1404
          %v1645 = vpack.c.b16 %v1409, %v1405
          %v1646 = vpack.c.b16 %v1410, %v1406
          %v1647 = vpack.c.b16 %v1415, %v1411
          %v1648 = vpack.c.b16 %v1416, %v1412
          %v1649 = vpack.c.b16 %v1417, %v1413
          %v1650 = vpack.c.b16 %v1418, %v1414
          %v1651 = vpack.c.b16 %v1423, %v1419
          %v1652 = vpack.c.b16 %v1424, %v1420
          %v1653 = vpack.c.b16 %v1425, %v1421
          %v1654 = vpack.c.b16 %v1426, %v1422
          %v1655 = vpack.c.b16 %v1431, %v1427
          %v1656 = vpack.c.b16 %v1432, %v1428
          %v1657 = vpack.c.b16 %v1433, %v1429
          %v1658 = vpack.c.b16 %v1434, %v1430
          %v1659 = vpack.c.b16 %v1439, %v1435
          %v1660 = vpack.c.b16 %v1440, %v1436
          %v1661 = vpack.c.b16 %v1441, %v1437
          %v1662 = vpack.c.b16 %v1442, %v1438
          %v1663 = vpack.c.b16 %v1447, %v1443
          %v1664 = vpack.c.b16 %v1448, %v1444
          %v1665 = vpack.c.b16 %v1449, %v1445
          %v1666 = vpack.c.b16 %v1450, %v1446
          %v1667 = vpack.c.b16 %v1455, %v1451
          %v1668 = vpack.c.b16 %v1456, %v1452
          %v1669 = vpack.c.b16 %v1457, %v1453
          %v1670 = vpack.c.b16 %v1458, %v1454
          %v1671 = vpack.c.b16 %v1463, %v1459
          %v1672 = vpack.c.b16 %v1464, %v1460
          %v1673 = vpack.c.b16 %v1465, %v1461
          %v1674 = vpack.c.b16 %v1466, %v1462
          %v1675 = vpack.c.b16 %v1471, %v1467
          %v1676 = vpack.c.b16 %v1472, %v1468
          %v1677 = vpack.c.b16 %v1473, %v1469
          %v1678 = vpack.c.b16 %v1474, %v1470
          %v1679 = vpack.c.b16 %v1479, %v1475
          %v1680 = vpack.c.b16 %v1480, %v1476
          %v1681 = vpack.c.b16 %v1481, %v1477
          %v1682 = vpack.c.b16 %v1482, %v1478
          %v1683 = vpack.c.b16 %v1487, %v1483
          %v1684 = vpack.c.b16 %v1488, %v1484
          %v1685 = vpack.c.b16 %v1489, %v1485
          %v1686 = vpack.c.b16 %v1490, %v1486
          %v1687 = vpack.c.b16 %v1495, %v1491
          %v1688 = vpack.c.b16 %v1496, %v1492
          %v1689 = vpack.c.b16 %v1497, %v1493
          %v1690 = vpack.c.b16 %v1498, %v1494
          %v1691 = vpack.c.b16 %v1503, %v1499
          %v1692 = vpack.c.b16 %v1504, %v1500
          %v1693 = vpack.c.b16 %v1505, %v1501
          %v1694 = vpack.c.b16 %v1506, %v1502
          %v1695 = vpack.c.b16 %v1511, %v1507
          %v1696 = vpack.c.b16 %v1512, %v1508
          %v1697 = vpack.c.b16 %v1513, %v1509
          %v1698 = vpack.c.b16 %v1514, %v1510
          %v1699 = vpack.c.b16 %v1519, %v1515
          %v1700 = vpack.c.b16 %v1520, %v1516
          %v1701 = vpack.c.b16 %v1521, %v1517
          %v1702 = vpack.c.b16 %v1522, %v1518
          %v1703 = vpack.c.b16 %v1527, %v1523
          %v1704 = vpack.c.b16 %v1528, %v1524
          %v1705 = vpack.c.b16 %v1529, %v1525
          %v1706 = vpack.c.b16 %v1530, %v1526
          %v1707 = vpack.c.b16 %v1535, %v1531
          %v1708 = vpack.c.b16 %v1536, %v1532
          %v1709 = vpack.c.b16 %v1537, %v1533
          %v1710 = vpack.c.b16 %v1538, %v1534
          %v1711 = vpack.c.b16 %v1543, %v1539
          %v1712 = vpack.c.b16 %v1544, %v1540
          %v1713 = vpack.c.b16 %v1545, %v1541
          %v1714 = vpack.c.b16 %v1546, %v1542
          %v1715 = vpack.c.b16 %v1551, %v1547
          %v1716 = vpack.c.b16 %v1552, %v1548
          %v1717 = vpack.c.b16 %v1553, %v1549
          %v1718 = vpack.c.b16 %v1554, %v1550
          %v1719 = vpack.c.b16 %v1559, %v1555
          %v1720 = vpack.c.b16 %v1560, %v1556
          %v1721 = vpack.c.b16 %v1561, %v1557
          %v1722 = vpack.c.b16 %v1562, %v1558
          %v1723 = vpack.c.b16 %v1567, %v1563
          %v1724 = vpack.c.b16 %v1568, %v1564
          %v1725 = vpack.c.b16 %v1569, %v1565
          %v1726 = vpack.c.b16 %v1570, %v1566
          %v1727 = vpack.c.b16 %v1575, %v1571
          %v1728 = vpack.c.b16 %v1576, %v1572
          %v1729 = vpack.c.b16 %v1577, %v1573
          %v1730 = vpack.c.b16 %v1578, %v1574
          %v1731 = vpack.c.b16 %v1583, %v1579
          %v1732 = vpack.c.b16 %v1584, %v1580
          %v1733 = vpack.c.b16 %v1585, %v1581
          %v1734 = vpack.c.b16 %v1586, %v1582
          %v1735 = vpack.c.b16 %v1591, %v1587
          %v1736 = vpack.c.b16 %v1592, %v1588
          %v1737 = vpack.c.b16 %v1593, %v1589
          %v1738 = vpack.c.b16 %v1594, %v1590
          %v1739 = vpack.c.b16 %v1599, %v1595
          %v1740 = vpack.c.b16 %v1600, %v1596
          %v1741 = vpack.c.b16 %v1601, %v1597
          %v1742 = vpack.c.b16 %v1602, %v1598
          %v1743 = vpack.c.b16 %v1607, %v1603
          %v1744 = vpack.c.b16 %v1608, %v1604
          %v1745 = vpack.c.b16 %v1609, %v1605
          %v1746 = vpack.c.b16 %v1610, %v1606
          %v1747 = vpack.c.b16 %v1615, %v1611
          %v1748 = vpack.c.b16 %v1616, %v1612
          %v1749 = vpack.c.b16 %v1617, %v1613
          %v1750 = vpack.c.b16 %v1618, %v1614
          %v1751 = vpack.c.b16 %v1623, %v1619
          %v1752 = vpack.c.b16 %v1624, %v1620
          %v1753 = vpack.c.b16 %v1625, %v1621
          %v1754 = vpack.c.b16 %v1626, %v1622
          %1883 = vmatprep.subr.bf16.mxu0 0
          %1884 = vmatpush1.bf16.msra.mxu0 %v1019
          %1885 = vmatprep.subr.bf16.mxu0 0
          %1886 = vmatpush1.bf16.msra.mxu0 %v1020
          %1887 = vmatprep.subr.bf16.mxu0 0
          %1888 = vmatpush1.bf16.msra.mxu0 %v1021
          %1889 = vmatprep.subr.bf16.mxu0 0
          %1890 = vmatpush1.bf16.msra.mxu0 %v1022
          %1891 = vmatprep.subr.bf16.mxu0 0
          %1892 = vmatpush1.bf16.msra.mxu0 %v1023
          %1893 = vmatprep.subr.bf16.mxu0 0
          %1894 = vmatpush1.bf16.msra.mxu0 %v1024
          %1895 = vmatprep.subr.bf16.mxu0 0
          %1896 = vmatpush1.bf16.msra.mxu0 %v1025
          %1897 = vmatprep.subr.bf16.mxu0 0
          %1898 = vmatpush1.bf16.msra.mxu0 %v1026
          %1899 = vmatprep.subr.bf16.mxu0 0
          %1900 = vmatpush1.bf16.msra.mxu0 %v1027
          %1901 = vmatprep.subr.bf16.mxu0 0
          %1902 = vmatpush1.bf16.msra.mxu0 %v1028
          %1903 = vmatprep.subr.bf16.mxu0 0
          %1904 = vmatpush1.bf16.msra.mxu0 %v1029
          %1905 = vmatprep.subr.bf16.mxu0 0
          %1906 = vmatpush1.bf16.msra.mxu0 %v1030
          %1907 = vmatprep.subr.bf16.mxu0 0
          %1908 = vmatpush1.bf16.msra.mxu0 %v1031
          %1909 = vmatprep.subr.bf16.mxu0 0
          %1910 = vmatpush1.bf16.msra.mxu0 %v1032
          %1911 = vmatprep.subr.bf16.mxu0 0
          %1912 = vmatpush1.bf16.msra.mxu0 %v1033
          %1913 = vmatprep.subr.bf16.mxu0 0
          %1914 = vmatpush1.bf16.msra.mxu0 %v1034
          %1915 = vmatprep.mubr.bf16.mxu0 %v1628
          %1916 = vmatmul.mubr.bf16.gmra.mrb[0].mxu0 %v1627
          %v1917 = vpop.f32.mrb[0].mxu0
          %v1918 = vadd.f32 0.0, %v1917
          %v1919 = vpop.f32.mrb[0].mxu0
          %v1920 = vpop.f32.mrb[0].mxu0
          %v1921 = vadd.f32 0.0, %v1920
          %v1922 = vpop.f32.mrb[0].mxu0
          %1923 = vmatprep.mubr.bf16.mxu0 %v1632
          %1924 = vmatmul.mubr.bf16.gmra.mrb[0].mxu0 %v1631
          %v1925 = vpop.f32.mrb[0].mxu0
          %v1926 = vadd.f32 0.0, %v1925
          %v1927 = vpop.f32.mrb[0].mxu0
          %v1928 = vpop.f32.mrb[0].mxu0
          %v1929 = vadd.f32 0.0, %v1928
          %v1930 = vpop.f32.mrb[0].mxu0
          %1931 = vmatprep.mubr.bf16.mxu0 %v1636
          %1932 = vmatmul.mubr.bf16.gmra.mrb[0].mxu0 %v1635
          %v1933 = vpop.f32.mrb[0].mxu0
          %v1934 = vadd.f32 0.0, %v1933
          %v1935 = vpop.f32.mrb[0].mxu0
          %v1936 = vpop.f32.mrb[0].mxu0
          %v1937 = vadd.f32 0.0, %v1936
          %v1938 = vpop.f32.mrb[0].mxu0
          %1939 = vmatprep.mubr.bf16.mxu0 %v1640
          %1940 = vmatmul.mubr.bf16.gmra.mrb[0].mxu0 %v1639
          %v1941 = vpop.f32.mrb[0].mxu0
          %v1942 = vadd.f32 0.0, %v1941
          %v1943 = vpop.f32.mrb[0].mxu0
          %v1944 = vpop.f32.mrb[0].mxu0
          %v1945 = vadd.f32 0.0, %v1944
          %v1946 = vpop.f32.mrb[0].mxu0
          %1947 = vmatprep.mubr.bf16.mxu0 %v1644
          %1948 = vmatmul.mubr.bf16.gmra.mrb[0].mxu0 %v1643
          %v1949 = vpop.f32.mrb[0].mxu0
          %v1950 = vadd.f32 0.0, %v1949
          %v1951 = vpop.f32.mrb[0].mxu0
          %v1952 = vpop.f32.mrb[0].mxu0
          %v1953 = vadd.f32 0.0, %v1952
          %v1954 = vpop.f32.mrb[0].mxu0
          %1955 = vmatprep.mubr.bf16.mxu0 %v1648
          %1956 = vmatmul.mubr.bf16.gmra.mrb[0].mxu0 %v1647
          %v1957 = vpop.f32.mrb[0].mxu0
          %v1958 = vadd.f32 0.0, %v1957
          %v1959 = vpop.f32.mrb[0].mxu0
          %v1960 = vpop.f32.mrb[0].mxu0
          %v1961 = vadd.f32 0.0, %v1960
          %v1962 = vpop.f32.mrb[0].mxu0
          %1963 = vmatprep.mubr.bf16.mxu0 %v1652
          %1964 = vmatmul.mubr.bf16.gmra.mrb[0].mxu0 %v1651
          %v1965 = vpop.f32.mrb[0].mxu0
          %v1966 = vadd.f32 0.0, %v1965
          %v1967 = vpop.f32.mrb[0].mxu0
          %v1968 = vpop.f32.mrb[0].mxu0
          %v1969 = vadd.f32 0.0, %v1968
          %v1970 = vpop.f32.mrb[0].mxu0
          %1971 = vmatprep.mubr.bf16.mxu0 %v1656
          %1972 = vmatmul.mubr.bf16.gmra.mrb[0].mxu0 %v1655
          %v1973 = vpop.f32.mrb[0].mxu0
          %v1974 = vadd.f32 0.0, %v1973
          %v1975 = vpop.f32.mrb[0].mxu0
          %v1976 = vpop.f32.mrb[0].mxu0
          %v1977 = vadd.f32 0.0, %v1976
          %v1978 = vpop.f32.mrb[0].mxu0
          %1979 = vmatprep.mubr.bf16.mxu0 %v1660
          %1980 = vmatmul.mubr.bf16.gmra.mrb[0].mxu0 %v1659
          %v1981 = vpop.f32.mrb[0].mxu0
          %v1982 = vadd.f32 0.0, %v1981
          %v1983 = vpop.f32.mrb[0].mxu0
          %v1984 = vpop.f32.mrb[0].mxu0
          %v1985 = vadd.f32 0.0, %v1984
          %v1986 = vpop.f32.mrb[0].mxu0
          %1987 = vmatprep.mubr.bf16.mxu0 %v1664
          %1988 = vmatmul.mubr.bf16.gmra.mrb[0].mxu0 %v1663
          %v1989 = vpop.f32.mrb[0].mxu0
          %v1990 = vadd.f32 0.0, %v1989
          %v1991 = vpop.f32.mrb[0].mxu0
          %v1992 = vpop.f32.mrb[0].mxu0
          %v1993 = vadd.f32 0.0, %v1992
          %v1994 = vpop.f32.mrb[0].mxu0
          %1995 = vmatprep.mubr.bf16.mxu0 %v1668
          %1996 = vmatmul.mubr.bf16.gmra.mrb[0].mxu0 %v1667
          %v1997 = vpop.f32.mrb[0].mxu0
          %v1998 = vadd.f32 0.0, %v1997
          %v1999 = vpop.f32.mrb[0].mxu0
          %v2000 = vpop.f32.mrb[0].mxu0
          %v2001 = vadd.f32 0.0, %v2000
          %v2002 = vpop.f32.mrb[0].mxu0
          %2003 = vmatprep.mubr.bf16.mxu0 %v1672
          %2004 = vmatmul.mubr.bf16.gmra.mrb[0].mxu0 %v1671
          %v2005 = vpop.f32.mrb[0].mxu0
          %v2006 = vadd.f32 0.0, %v2005
          %v2007 = vpop.f32.mrb[0].mxu0
          %v2008 = vpop.f32.mrb[0].mxu0
          %v2009 = vadd.f32 0.0, %v2008
          %v2010 = vpop.f32.mrb[0].mxu0
          %2011 = vmatprep.mubr.bf16.mxu0 %v1676
          %2012 = vmatmul.mubr.bf16.gmra.mrb[0].mxu0 %v1675
          %v2013 = vpop.f32.mrb[0].mxu0
          %v2014 = vadd.f32 0.0, %v2013
          %v2015 = vpop.f32.mrb[0].mxu0
          %v2016 = vpop.f32.mrb[0].mxu0
          %v2017 = vadd.f32 0.0, %v2016
          %v2018 = vpop.f32.mrb[0].mxu0
          %2019 = vmatprep.mubr.bf16.mxu0 %v1680
          %2020 = vmatmul.mubr.bf16.gmra.mrb[0].mxu0 %v1679
          %v2021 = vpop.f32.mrb[0].mxu0
          %v2022 = vadd.f32 0.0, %v2021
          %v2023 = vpop.f32.mrb[0].mxu0
          %v2024 = vpop.f32.mrb[0].mxu0
          %v2025 = vadd.f32 0.0, %v2024
          %v2026 = vpop.f32.mrb[0].mxu0
          %2027 = vmatprep.mubr.bf16.mxu0 %v1684
          %2028 = vmatmul.mubr.bf16.gmra.mrb[0].mxu0 %v1683
          %v2029 = vpop.f32.mrb[0].mxu0
          %v2030 = vadd.f32 0.0, %v2029
          %v2031 = vpop.f32.mrb[0].mxu0
          %v2032 = vpop.f32.mrb[0].mxu0
          %v2033 = vadd.f32 0.0, %v2032
          %v2034 = vpop.f32.mrb[0].mxu0
          %2035 = vmatprep.mubr.bf16.mxu0 %v1688
          %2036 = vmatmul.mubr.bf16.gmra.mrb[0].mxu0 %v1687
          %v2037 = vpop.f32.mrb[0].mxu0
          %v2038 = vadd.f32 0.0, %v2037
          %v2039 = vpop.f32.mrb[0].mxu0
          %v2040 = vpop.f32.mrb[0].mxu0
          %v2041 = vadd.f32 0.0, %v2040
          %v2042 = vpop.f32.mrb[0].mxu0
          %2043 = vmatprep.mubr.bf16.mxu0 %v1692
          %2044 = vmatmul.mubr.bf16.gmra.mrb[0].mxu0 %v1691
          %v2045 = vpop.f32.mrb[0].mxu0
          %v2046 = vadd.f32 0.0, %v2045
          %v2047 = vpop.f32.mrb[0].mxu0
          %v2048 = vpop.f32.mrb[0].mxu0
          %v2049 = vadd.f32 0.0, %v2048
          %v2050 = vpop.f32.mrb[0].mxu0
          %2051 = vmatprep.mubr.bf16.mxu0 %v1696
          %2052 = vmatmul.mubr.bf16.gmra.mrb[0].mxu0 %v1695
          %v2053 = vpop.f32.mrb[0].mxu0
          %v2054 = vadd.f32 0.0, %v2053
          %v2055 = vpop.f32.mrb[0].mxu0
          %v2056 = vpop.f32.mrb[0].mxu0
          %v2057 = vadd.f32 0.0, %v2056
          %v2058 = vpop.f32.mrb[0].mxu0
          %2059 = vmatprep.mubr.bf16.mxu0 %v1700
          %2060 = vmatmul.mubr.bf16.gmra.mrb[0].mxu0 %v1699
          %v2061 = vpop.f32.mrb[0].mxu0
          %v2062 = vadd.f32 0.0, %v2061
          %v2063 = vpop.f32.mrb[0].mxu0
          %v2064 = vpop.f32.mrb[0].mxu0
          %v2065 = vadd.f32 0.0, %v2064
          %v2066 = vpop.f32.mrb[0].mxu0
          %2067 = vmatprep.mubr.bf16.mxu0 %v1704
          %2068 = vmatmul.mubr.bf16.gmra.mrb[0].mxu0 %v1703
          %v2069 = vpop.f32.mrb[0].mxu0
          %v2070 = vadd.f32 0.0, %v2069
          %v2071 = vpop.f32.mrb[0].mxu0
          %v2072 = vpop.f32.mrb[0].mxu0
          %v2073 = vadd.f32 0.0, %v2072
          %v2074 = vpop.f32.mrb[0].mxu0
          %2075 = vmatprep.mubr.bf16.mxu0 %v1708
          %2076 = vmatmul.mubr.bf16.gmra.mrb[0].mxu0 %v1707
          %v2077 = vpop.f32.mrb[0].mxu0
          %v2078 = vadd.f32 0.0, %v2077
          %v2079 = vpop.f32.mrb[0].mxu0
          %v2080 = vpop.f32.mrb[0].mxu0
          %v2081 = vadd.f32 0.0, %v2080
          %v2082 = vpop.f32.mrb[0].mxu0
          %2083 = vmatprep.mubr.bf16.mxu0 %v1712
          %2084 = vmatmul.mubr.bf16.gmra.mrb[0].mxu0 %v1711
          %v2085 = vpop.f32.mrb[0].mxu0
          %v2086 = vadd.f32 0.0, %v2085
          %v2087 = vpop.f32.mrb[0].mxu0
          %v2088 = vpop.f32.mrb[0].mxu0
          %v2089 = vadd.f32 0.0, %v2088
          %v2090 = vpop.f32.mrb[0].mxu0
          %2091 = vmatprep.mubr.bf16.mxu0 %v1716
          %2092 = vmatmul.mubr.bf16.gmra.mrb[0].mxu0 %v1715
          %v2093 = vpop.f32.mrb[0].mxu0
          %v2094 = vadd.f32 0.0, %v2093
          %v2095 = vpop.f32.mrb[0].mxu0
          %v2096 = vpop.f32.mrb[0].mxu0
          %v2097 = vadd.f32 0.0, %v2096
          %v2098 = vpop.f32.mrb[0].mxu0
          %2099 = vmatprep.mubr.bf16.mxu0 %v1720
          %2100 = vmatmul.mubr.bf16.gmra.mrb[0].mxu0 %v1719
          %v2101 = vpop.f32.mrb[0].mxu0
          %v2102 = vadd.f32 0.0, %v2101
          %v2103 = vpop.f32.mrb[0].mxu0
          %v2104 = vpop.f32.mrb[0].mxu0
          %v2105 = vadd.f32 0.0, %v2104
          %v2106 = vpop.f32.mrb[0].mxu0
          %2107 = vmatprep.mubr.bf16.mxu0 %v1724
          %2108 = vmatmul.mubr.bf16.gmra.mrb[0].mxu0 %v1723
          %v2109 = vpop.f32.mrb[0].mxu0
          %v2110 = vadd.f32 0.0, %v2109
          %v2111 = vpop.f32.mrb[0].mxu0
          %v2112 = vpop.f32.mrb[0].mxu0
          %v2113 = vadd.f32 0.0, %v2112
          %v2114 = vpop.f32.mrb[0].mxu0
          %2115 = vmatprep.mubr.bf16.mxu0 %v1728
          %2116 = vmatmul.mubr.bf16.gmra.mrb[0].mxu0 %v1727
          %v2117 = vpop.f32.mrb[0].mxu0
          %v2118 = vadd.f32 0.0, %v2117
          %v2119 = vpop.f32.mrb[0].mxu0
          %v2120 = vpop.f32.mrb[0].mxu0
          %v2121 = vadd.f32 0.0, %v2120
          %v2122 = vpop.f32.mrb[0].mxu0
          %2123 = vmatprep.mubr.bf16.mxu0 %v1732
          %2124 = vmatmul.mubr.bf16.gmra.mrb[0].mxu0 %v1731
          %v2125 = vpop.f32.mrb[0].mxu0
          %v2126 = vadd.f32 0.0, %v2125
          %v2127 = vpop.f32.mrb[0].mxu0
          %v2128 = vpop.f32.mrb[0].mxu0
          %v2129 = vadd.f32 0.0, %v2128
          %v2130 = vpop.f32.mrb[0].mxu0
          %2131 = vmatprep.mubr.bf16.mxu0 %v1736
          %2132 = vmatmul.mubr.bf16.gmra.mrb[0].mxu0 %v1735
          %v2133 = vpop.f32.mrb[0].mxu0
          %v2134 = vadd.f32 0.0, %v2133
          %v2135 = vpop.f32.mrb[0].mxu0
          %v2136 = vpop.f32.mrb[0].mxu0
          %v2137 = vadd.f32 0.0, %v2136
          %v2138 = vpop.f32.mrb[0].mxu0
          %2139 = vmatprep.mubr.bf16.mxu0 %v1740
          %2140 = vmatmul.mubr.bf16.gmra.mrb[0].mxu0 %v1739
          %v2141 = vpop.f32.mrb[0].mxu0
          %v2142 = vadd.f32 0.0, %v2141
          %v2143 = vpop.f32.mrb[0].mxu0
          %v2144 = vpop.f32.mrb[0].mxu0
          %v2145 = vadd.f32 0.0, %v2144
          %v2146 = vpop.f32.mrb[0].mxu0
          %2147 = vmatprep.mubr.bf16.mxu0 %v1744
          %2148 = vmatmul.mubr.bf16.gmra.mrb[0].mxu0 %v1743
          %v2149 = vpop.f32.mrb[0].mxu0
          %v2150 = vadd.f32 0.0, %v2149
          %v2151 = vpop.f32.mrb[0].mxu0
          %v2152 = vpop.f32.mrb[0].mxu0
          %v2153 = vadd.f32 0.0, %v2152
          %v2154 = vpop.f32.mrb[0].mxu0
          %2155 = vmatprep.mubr.bf16.mxu0 %v1748
          %2156 = vmatmul.mubr.bf16.gmra.mrb[0].mxu0 %v1747
          %v2157 = vpop.f32.mrb[0].mxu0
          %v2158 = vadd.f32 0.0, %v2157
          %v2159 = vpop.f32.mrb[0].mxu0
          %v2160 = vpop.f32.mrb[0].mxu0
          %v2161 = vadd.f32 0.0, %v2160
          %v2162 = vpop.f32.mrb[0].mxu0
          %2163 = vmatprep.mubr.bf16.mxu0 %v1752
          %2164 = vmatmul.mubr.bf16.gmra.mrb[0].mxu0 %v1751
          %v2165 = vpop.f32.mrb[0].mxu0
          %v2166 = vadd.f32 0.0, %v2165
          %v2167 = vpop.f32.mrb[0].mxu0
          %v2168 = vpop.f32.mrb[0].mxu0
          %v2169 = vadd.f32 0.0, %v2168
          %v2170 = vpop.f32.mrb[0].mxu0
          %2171 = vdwg.mxu0
          %2172 = vmatprep.subr.bf16.mxu0 0
          %2173 = vmatpush1.bf16.msra.mxu0 %v1035
          %2174 = vmatprep.subr.bf16.mxu0 0
          %2175 = vmatpush1.bf16.msra.mxu0 %v1036
          %2176 = vmatprep.subr.bf16.mxu0 0
          %2177 = vmatpush1.bf16.msra.mxu0 %v1037
          %2178 = vmatprep.subr.bf16.mxu0 0
          %2179 = vmatpush1.bf16.msra.mxu0 %v1038
          %2180 = vmatprep.subr.bf16.mxu0 0
          %2181 = vmatpush1.bf16.msra.mxu0 %v1039
          %2182 = vmatprep.subr.bf16.mxu0 0
          %2183 = vmatpush1.bf16.msra.mxu0 %v1040
          %2184 = vmatprep.subr.bf16.mxu0 0
          %2185 = vmatpush1.bf16.msra.mxu0 %v1041
          %2186 = vmatprep.subr.bf16.mxu0 0
          %2187 = vmatpush1.bf16.msra.mxu0 %v1042
          %2188 = vmatprep.subr.bf16.mxu0 0
          %2189 = vmatpush1.bf16.msra.mxu0 %v1043
          %2190 = vmatprep.subr.bf16.mxu0 0
          %2191 = vmatpush1.bf16.msra.mxu0 %v1044
          %2192 = vmatprep.subr.bf16.mxu0 0
          %2193 = vmatpush1.bf16.msra.mxu0 %v1045
          %2194 = vmatprep.subr.bf16.mxu0 0
          %2195 = vmatpush1.bf16.msra.mxu0 %v1046
          %2196 = vmatprep.subr.bf16.mxu0 0
          %2197 = vmatpush1.bf16.msra.mxu0 %v1047
          %2198 = vmatprep.subr.bf16.mxu0 0
          %2199 = vmatpush1.bf16.msra.mxu0 %v1048
          %2200 = vmatprep.subr.bf16.mxu0 0
          %2201 = vmatpush1.bf16.msra.mxu0 %v1049
          %2202 = vmatprep.subr.bf16.mxu0 0
          %2203 = vmatpush1.bf16.msra.mxu0 %v1050
          %2204 = vmatprep.mubr.bf16.mxu0 %v1630
          %2205 = vmatmul.mubr.bf16.gmra.mrb[0].mxu0 %v1629
          %v2206 = vpop.f32.mrb[0].mxu0
          %v2207 = vadd.f32 %v1918, %v2206
          %v2208 = vpop.f32.mrb[0].mxu0
          %v2209 = vpop.f32.mrb[0].mxu0
          %v2210 = vadd.f32 %v1921, %v2209
          %v2211 = vpop.f32.mrb[0].mxu0
          %2212 = vmatprep.mubr.bf16.mxu0 %v1634
          %2213 = vmatmul.mubr.bf16.gmra.mrb[0].mxu0 %v1633
          %v2214 = vpop.f32.mrb[0].mxu0
          %v2215 = vadd.f32 %v1926, %v2214
          %v2216 = vpop.f32.mrb[0].mxu0
          %v2217 = vpop.f32.mrb[0].mxu0
          %v2218 = vadd.f32 %v1929, %v2217
          %v2219 = vpop.f32.mrb[0].mxu0
          %2220 = vmatprep.mubr.bf16.mxu0 %v1638
          %2221 = vmatmul.mubr.bf16.gmra.mrb[0].mxu0 %v1637
          %v2222 = vpop.f32.mrb[0].mxu0
          %v2223 = vadd.f32 %v1934, %v2222
          %v2224 = vpop.f32.mrb[0].mxu0
          %v2225 = vpop.f32.mrb[0].mxu0
          %v2226 = vadd.f32 %v1937, %v2225
          %v2227 = vpop.f32.mrb[0].mxu0
          %2228 = vmatprep.mubr.bf16.mxu0 %v1642
          %2229 = vmatmul.mubr.bf16.gmra.mrb[0].mxu0 %v1641
          %v2230 = vpop.f32.mrb[0].mxu0
          %v2231 = vadd.f32 %v1942, %v2230
          %v2232 = vpop.f32.mrb[0].mxu0
          %v2233 = vpop.f32.mrb[0].mxu0
          %v2234 = vadd.f32 %v1945, %v2233
          %v2235 = vpop.f32.mrb[0].mxu0
          %2236 = vmatprep.mubr.bf16.mxu0 %v1646
          %2237 = vmatmul.mubr.bf16.gmra.mrb[0].mxu0 %v1645
          %v2238 = vpop.f32.mrb[0].mxu0
          %v2239 = vadd.f32 %v1950, %v2238
          %v2240 = vpop.f32.mrb[0].mxu0
          %v2241 = vpop.f32.mrb[0].mxu0
          %v2242 = vadd.f32 %v1953, %v2241
          %v2243 = vpop.f32.mrb[0].mxu0
          %2244 = vmatprep.mubr.bf16.mxu0 %v1650
          %2245 = vmatmul.mubr.bf16.gmra.mrb[0].mxu0 %v1649
          %v2246 = vpop.f32.mrb[0].mxu0
          %v2247 = vadd.f32 %v1958, %v2246
          %v2248 = vpop.f32.mrb[0].mxu0
          %v2249 = vpop.f32.mrb[0].mxu0
          %v2250 = vadd.f32 %v1961, %v2249
          %v2251 = vpop.f32.mrb[0].mxu0
          %2252 = vmatprep.mubr.bf16.mxu0 %v1654
          %2253 = vmatmul.mubr.bf16.gmra.mrb[0].mxu0 %v1653
          %v2254 = vpop.f32.mrb[0].mxu0
          %v2255 = vadd.f32 %v1966, %v2254
          %v2256 = vpop.f32.mrb[0].mxu0
          %v2257 = vpop.f32.mrb[0].mxu0
          %v2258 = vadd.f32 %v1969, %v2257
          %v2259 = vpop.f32.mrb[0].mxu0
          %2260 = vmatprep.mubr.bf16.mxu0 %v1658
          %2261 = vmatmul.mubr.bf16.gmra.mrb[0].mxu0 %v1657
          %v2262 = vpop.f32.mrb[0].mxu0
          %v2263 = vadd.f32 %v1974, %v2262
          %v2264 = vpop.f32.mrb[0].mxu0
          %v2265 = vpop.f32.mrb[0].mxu0
          %v2266 = vadd.f32 %v1977, %v2265
          %v2267 = vpop.f32.mrb[0].mxu0
          %2268 = vmatprep.mubr.bf16.mxu0 %v1662
          %2269 = vmatmul.mubr.bf16.gmra.mrb[0].mxu0 %v1661
          %v2270 = vpop.f32.mrb[0].mxu0
          %v2271 = vadd.f32 %v1982, %v2270
          %v2272 = vpop.f32.mrb[0].mxu0
          %v2273 = vpop.f32.mrb[0].mxu0
          %v2274 = vadd.f32 %v1985, %v2273
          %v2275 = vpop.f32.mrb[0].mxu0
          %2276 = vmatprep.mubr.bf16.mxu0 %v1666
          %2277 = vmatmul.mubr.bf16.gmra.mrb[0].mxu0 %v1665
          %v2278 = vpop.f32.mrb[0].mxu0
          %v2279 = vadd.f32 %v1990, %v2278
          %v2280 = vpop.f32.mrb[0].mxu0
          %v2281 = vpop.f32.mrb[0].mxu0
          %v2282 = vadd.f32 %v1993, %v2281
          %v2283 = vpop.f32.mrb[0].mxu0
          %2284 = vmatprep.mubr.bf16.mxu0 %v1670
          %2285 = vmatmul.mubr.bf16.gmra.mrb[0].mxu0 %v1669
          %v2286 = vpop.f32.mrb[0].mxu0
          %v2287 = vadd.f32 %v1998, %v2286
          %v2288 = vpop.f32.mrb[0].mxu0
          %v2289 = vpop.f32.mrb[0].mxu0
          %v2290 = vadd.f32 %v2001, %v2289
          %v2291 = vpop.f32.mrb[0].mxu0
          %2292 = vmatprep.mubr.bf16.mxu0 %v1674
          %2293 = vmatmul.mubr.bf16.gmra.mrb[0].mxu0 %v1673
          %v2294 = vpop.f32.mrb[0].mxu0
          %v2295 = vadd.f32 %v2006, %v2294
          %v2296 = vpop.f32.mrb[0].mxu0
          %v2297 = vpop.f32.mrb[0].mxu0
          %v2298 = vadd.f32 %v2009, %v2297
          %v2299 = vpop.f32.mrb[0].mxu0
          %2300 = vmatprep.mubr.bf16.mxu0 %v1678
          %2301 = vmatmul.mubr.bf16.gmra.mrb[0].mxu0 %v1677
          %v2302 = vpop.f32.mrb[0].mxu0
          %v2303 = vadd.f32 %v2014, %v2302
          %v2304 = vpop.f32.mrb[0].mxu0
          %v2305 = vpop.f32.mrb[0].mxu0
          %v2306 = vadd.f32 %v2017, %v2305
          %v2307 = vpop.f32.mrb[0].mxu0
          %2308 = vmatprep.mubr.bf16.mxu0 %v1682
          %2309 = vmatmul.mubr.bf16.gmra.mrb[0].mxu0 %v1681
          %v2310 = vpop.f32.mrb[0].mxu0
          %v2311 = vadd.f32 %v2022, %v2310
          %v2312 = vpop.f32.mrb[0].mxu0
          %v2313 = vpop.f32.mrb[0].mxu0
          %v2314 = vadd.f32 %v2025, %v2313
          %v2315 = vpop.f32.mrb[0].mxu0
          %2316 = vmatprep.mubr.bf16.mxu0 %v1686
          %2317 = vmatmul.mubr.bf16.gmra.mrb[0].mxu0 %v1685
          %v2318 = vpop.f32.mrb[0].mxu0
          %v2319 = vadd.f32 %v2030, %v2318
          %v2320 = vpop.f32.mrb[0].mxu0
          %v2321 = vpop.f32.mrb[0].mxu0
          %v2322 = vadd.f32 %v2033, %v2321
          %v2323 = vpop.f32.mrb[0].mxu0
          %2324 = vmatprep.mubr.bf16.mxu0 %v1690
          %2325 = vmatmul.mubr.bf16.gmra.mrb[0].mxu0 %v1689
          %v2326 = vpop.f32.mrb[0].mxu0
          %v2327 = vadd.f32 %v2038, %v2326
          %v2328 = vpop.f32.mrb[0].mxu0
          %v2329 = vpop.f32.mrb[0].mxu0
          %v2330 = vadd.f32 %v2041, %v2329
          %v2331 = vpop.f32.mrb[0].mxu0
          %2332 = vmatprep.mubr.bf16.mxu0 %v1694
          %2333 = vmatmul.mubr.bf16.gmra.mrb[0].mxu0 %v1693
          %v2334 = vpop.f32.mrb[0].mxu0
          %v2335 = vadd.f32 %v2046, %v2334
          %v2336 = vpop.f32.mrb[0].mxu0
          %v2337 = vpop.f32.mrb[0].mxu0
          %v2338 = vadd.f32 %v2049, %v2337
          %v2339 = vpop.f32.mrb[0].mxu0
          %2340 = vmatprep.mubr.bf16.mxu0 %v1698
          %2341 = vmatmul.mubr.bf16.gmra.mrb[0].mxu0 %v1697
          %v2342 = vpop.f32.mrb[0].mxu0
          %v2343 = vadd.f32 %v2054, %v2342
          %v2344 = vpop.f32.mrb[0].mxu0
          %v2345 = vpop.f32.mrb[0].mxu0
          %v2346 = vadd.f32 %v2057, %v2345
          %v2347 = vpop.f32.mrb[0].mxu0
          %2348 = vmatprep.mubr.bf16.mxu0 %v1702
          %2349 = vmatmul.mubr.bf16.gmra.mrb[0].mxu0 %v1701
          %v2350 = vpop.f32.mrb[0].mxu0
          %v2351 = vadd.f32 %v2062, %v2350
          %v2352 = vpop.f32.mrb[0].mxu0
          %v2353 = vpop.f32.mrb[0].mxu0
          %v2354 = vadd.f32 %v2065, %v2353
          %v2355 = vpop.f32.mrb[0].mxu0
          %2356 = vmatprep.mubr.bf16.mxu0 %v1706
          %2357 = vmatmul.mubr.bf16.gmra.mrb[0].mxu0 %v1705
          %v2358 = vpop.f32.mrb[0].mxu0
          %v2359 = vadd.f32 %v2070, %v2358
          %v2360 = vpop.f32.mrb[0].mxu0
          %v2361 = vpop.f32.mrb[0].mxu0
          %v2362 = vadd.f32 %v2073, %v2361
          %v2363 = vpop.f32.mrb[0].mxu0
          %2364 = vmatprep.mubr.bf16.mxu0 %v1710
          %2365 = vmatmul.mubr.bf16.gmra.mrb[0].mxu0 %v1709
          %v2366 = vpop.f32.mrb[0].mxu0
          %v2367 = vadd.f32 %v2078, %v2366
          %v2368 = vpop.f32.mrb[0].mxu0
          %v2369 = vpop.f32.mrb[0].mxu0
          %v2370 = vadd.f32 %v2081, %v2369
          %v2371 = vpop.f32.mrb[0].mxu0
          %2372 = vmatprep.mubr.bf16.mxu0 %v1714
          %2373 = vmatmul.mubr.bf16.gmra.mrb[0].mxu0 %v1713
          %v2374 = vpop.f32.mrb[0].mxu0
          %v2375 = vadd.f32 %v2086, %v2374
          %v2376 = vpop.f32.mrb[0].mxu0
          %v2377 = vpop.f32.mrb[0].mxu0
          %v2378 = vadd.f32 %v2089, %v2377
          %v2379 = vpop.f32.mrb[0].mxu0
          %2380 = vmatprep.mubr.bf16.mxu0 %v1718
          %2381 = vmatmul.mubr.bf16.gmra.mrb[0].mxu0 %v1717
          %v2382 = vpop.f32.mrb[0].mxu0
          %v2383 = vadd.f32 %v2094, %v2382
          %v2384 = vpop.f32.mrb[0].mxu0
          %v2385 = vpop.f32.mrb[0].mxu0
          %v2386 = vadd.f32 %v2097, %v2385
          %v2387 = vpop.f32.mrb[0].mxu0
          %2388 = vmatprep.mubr.bf16.mxu0 %v1722
          %2389 = vmatmul.mubr.bf16.gmra.mrb[0].mxu0 %v1721
          %v2390 = vpop.f32.mrb[0].mxu0
          %v2391 = vadd.f32 %v2102, %v2390
          %v2392 = vpop.f32.mrb[0].mxu0
          %v2393 = vpop.f32.mrb[0].mxu0
          %v2394 = vadd.f32 %v2105, %v2393
          %v2395 = vpop.f32.mrb[0].mxu0
          %2396 = vmatprep.mubr.bf16.mxu0 %v1726
          %2397 = vmatmul.mubr.bf16.gmra.mrb[0].mxu0 %v1725
          %v2398 = vpop.f32.mrb[0].mxu0
          %v2399 = vadd.f32 %v2110, %v2398
          %v2400 = vpop.f32.mrb[0].mxu0
          %v2401 = vpop.f32.mrb[0].mxu0
          %v2402 = vadd.f32 %v2113, %v2401
          %v2403 = vpop.f32.mrb[0].mxu0
          %2404 = vmatprep.mubr.bf16.mxu0 %v1730
          %2405 = vmatmul.mubr.bf16.gmra.mrb[0].mxu0 %v1729
          %v2406 = vpop.f32.mrb[0].mxu0
          %v2407 = vadd.f32 %v2118, %v2406
          %v2408 = vpop.f32.mrb[0].mxu0
          %v2409 = vpop.f32.mrb[0].mxu0
          %v2410 = vadd.f32 %v2121, %v2409
          %v2411 = vpop.f32.mrb[0].mxu0
          %2412 = vmatprep.mubr.bf16.mxu0 %v1734
          %2413 = vmatmul.mubr.bf16.gmra.mrb[0].mxu0 %v1733
          %v2414 = vpop.f32.mrb[0].mxu0
          %v2415 = vadd.f32 %v2126, %v2414
          %v2416 = vpop.f32.mrb[0].mxu0
          %v2417 = vpop.f32.mrb[0].mxu0
          %v2418 = vadd.f32 %v2129, %v2417
          %v2419 = vpop.f32.mrb[0].mxu0
          %2420 = vmatprep.mubr.bf16.mxu0 %v1738
          %2421 = vmatmul.mubr.bf16.gmra.mrb[0].mxu0 %v1737
          %v2422 = vpop.f32.mrb[0].mxu0
          %v2423 = vadd.f32 %v2134, %v2422
          %v2424 = vpop.f32.mrb[0].mxu0
          %v2425 = vpop.f32.mrb[0].mxu0
          %v2426 = vadd.f32 %v2137, %v2425
          %v2427 = vpop.f32.mrb[0].mxu0
          %2428 = vmatprep.mubr.bf16.mxu0 %v1742
          %2429 = vmatmul.mubr.bf16.gmra.mrb[0].mxu0 %v1741
          %v2430 = vpop.f32.mrb[0].mxu0
          %v2431 = vadd.f32 %v2142, %v2430
          %v2432 = vpop.f32.mrb[0].mxu0
          %v2433 = vpop.f32.mrb[0].mxu0
          %v2434 = vadd.f32 %v2145, %v2433
          %v2435 = vpop.f32.mrb[0].mxu0
          %2436 = vmatprep.mubr.bf16.mxu0 %v1746
          %2437 = vmatmul.mubr.bf16.gmra.mrb[0].mxu0 %v1745
          %v2438 = vpop.f32.mrb[0].mxu0
          %v2439 = vadd.f32 %v2150, %v2438
          %v2440 = vpop.f32.mrb[0].mxu0
          %v2441 = vpop.f32.mrb[0].mxu0
          %v2442 = vadd.f32 %v2153, %v2441
          %v2443 = vpop.f32.mrb[0].mxu0
          %2444 = vmatprep.mubr.bf16.mxu0 %v1750
          %2445 = vmatmul.mubr.bf16.gmra.mrb[0].mxu0 %v1749
          %v2446 = vpop.f32.mrb[0].mxu0
          %v2447 = vadd.f32 %v2158, %v2446
          %v2448 = vpop.f32.mrb[0].mxu0
          %v2449 = vpop.f32.mrb[0].mxu0
          %v2450 = vadd.f32 %v2161, %v2449
          %v2451 = vpop.f32.mrb[0].mxu0
          %2452 = vmatprep.mubr.bf16.mxu0 %v1754
          %2453 = vmatmul.mubr.bf16.gmra.mrb[0].mxu0 %v1753
          %v2454 = vpop.f32.mrb[0].mxu0
          %v2455 = vadd.f32 %v2166, %v2454
          %v2456 = vpop.f32.mrb[0].mxu0
          %v2457 = vpop.f32.mrb[0].mxu0
          %v2458 = vadd.f32 %v2169, %v2457
          %v2459 = vpop.f32.mrb[0].mxu0
          %2460 = vdwg.mxu0
          %v2461 = vadd.f32 %v1051, %v2207
          %v2462 = vadd.f32 %v1052, %v2210
          %v2463 = vadd.f32 %v1053, %v2215
          %v2464 = vadd.f32 %v1054, %v2218
          %v2465 = vadd.f32 %v1055, %v2223
          %v2466 = vadd.f32 %v1056, %v2226
          %v2467 = vadd.f32 %v1057, %v2231
          %v2468 = vadd.f32 %v1058, %v2234
          %v2469 = vadd.f32 %v1059, %v2239
          %v2470 = vadd.f32 %v1060, %v2242
          %v2471 = vadd.f32 %v1061, %v2247
          %v2472 = vadd.f32 %v1062, %v2250
          %v2473 = vadd.f32 %v1063, %v2255
          %v2474 = vadd.f32 %v1064, %v2258
          %v2475 = vadd.f32 %v1065, %v2263
          %v2476 = vadd.f32 %v1066, %v2266
          %v2477 = vadd.f32 %v1067, %v2271
          %v2478 = vadd.f32 %v1068, %v2274
          %v2479 = vadd.f32 %v1069, %v2279
          %v2480 = vadd.f32 %v1070, %v2282
          %v2481 = vadd.f32 %v1071, %v2287
          %v2482 = vadd.f32 %v1072, %v2290
          %v2483 = vadd.f32 %v1073, %v2295
          %v2484 = vadd.f32 %v1074, %v2298
          %v2485 = vadd.f32 %v1075, %v2303
          %v2486 = vadd.f32 %v1076, %v2306
          %v2487 = vadd.f32 %v1077, %v2311
          %v2488 = vadd.f32 %v1078, %v2314
          %v2489 = vadd.f32 %v1079, %v2319
          %v2490 = vadd.f32 %v1080, %v2322
          %v2491 = vadd.f32 %v1081, %v2327
          %v2492 = vadd.f32 %v1082, %v2330
          %v2493 = vadd.f32 %v1083, %v2335
          %v2494 = vadd.f32 %v1084, %v2338
          %v2495 = vadd.f32 %v1085, %v2343
          %v2496 = vadd.f32 %v1086, %v2346
          %v2497 = vadd.f32 %v1087, %v2351
          %v2498 = vadd.f32 %v1088, %v2354
          %v2499 = vadd.f32 %v1089, %v2359
          %v2500 = vadd.f32 %v1090, %v2362
          %v2501 = vadd.f32 %v1091, %v2367
          %v2502 = vadd.f32 %v1092, %v2370
          %v2503 = vadd.f32 %v1093, %v2375
          %v2504 = vadd.f32 %v1094, %v2378
          %v2505 = vadd.f32 %v1095, %v2383
          %v2506 = vadd.f32 %v1096, %v2386
          %v2507 = vadd.f32 %v1097, %v2391
          %v2508 = vadd.f32 %v1098, %v2394
          %v2509 = vadd.f32 %v1099, %v2399
          %v2510 = vadd.f32 %v1100, %v2402
          %v2511 = vadd.f32 %v1101, %v2407
          %v2512 = vadd.f32 %v1102, %v2410
          %v2513 = vadd.f32 %v1103, %v2415
          %v2514 = vadd.f32 %v1104, %v2418
          %v2515 = vadd.f32 %v1105, %v2423
          %v2516 = vadd.f32 %v1106, %v2426
          %v2517 = vadd.f32 %v1107, %v2431
          %v2518 = vadd.f32 %v1108, %v2434
          %v2519 = vadd.f32 %v1109, %v2439
          %v2520 = vadd.f32 %v1110, %v2442
          %v2521 = vadd.f32 %v1111, %v2447
          %v2522 = vadd.f32 %v1112, %v2450
          %v2523 = vadd.f32 %v1113, %v2455
          %v2524 = vadd.f32 %v1114, %v2458
          %2525 = vst [vmem:[#allocation2] sm:$0xff] %v2461
          %2526 = vst [vmem:[#allocation2 + $0x8] sm:$0xff] %v2462
          %2527 = vst [vmem:[#allocation2 + $0x10] sm:$0xff] %v2463
          %2528 = vst [vmem:[#allocation2 + $0x18] sm:$0xff] %v2464
          %2529 = vst [vmem:[#allocation2 + $0x20] sm:$0xff] %v2465
          %2530 = vst [vmem:[#allocation2 + $0x28] sm:$0xff] %v2466
          %2531 = vst [vmem:[#allocation2 + $0x30] sm:$0xff] %v2467
          %2532 = vst [vmem:[#allocation2 + $0x38] sm:$0xff] %v2468
          %2533 = vst [vmem:[#allocation2 + $0x40] sm:$0xff] %v2469
          %2534 = vst [vmem:[#allocation2 + $0x48] sm:$0xff] %v2470
          %2535 = vst [vmem:[#allocation2 + $0x50] sm:$0xff] %v2471
          %2536 = vst [vmem:[#allocation2 + $0x58] sm:$0xff] %v2472
          %2537 = vst [vmem:[#allocation2 + $0x60] sm:$0xff] %v2473
          %2538 = vst [vmem:[#allocation2 + $0x68] sm:$0xff] %v2474
          %2539 = vst [vmem:[#allocation2 + $0x70] sm:$0xff] %v2475
          %2540 = vst [vmem:[#allocation2 + $0x78] sm:$0xff] %v2476
          %2541 = vst [vmem:[#allocation2 + $0x80] sm:$0xff] %v2477
          %2542 = vst [vmem:[#allocation2 + $0x88] sm:$0xff] %v2478
          %2543 = vst [vmem:[#allocation2 + $0x90] sm:$0xff] %v2479
          %2544 = vst [vmem:[#allocation2 + $0x98] sm:$0xff] %v2480
          %2545 = vst [vmem:[#allocation2 + $0xa0] sm:$0xff] %v2481
          %2546 = vst [vmem:[#allocation2 + $0xa8] sm:$0xff] %v2482
          %2547 = vst [vmem:[#allocation2 + $0xb0] sm:$0xff] %v2483
          %2548 = vst [vmem:[#allocation2 + $0xb8] sm:$0xff] %v2484
          %2549 = vst [vmem:[#allocation2 + $0xc0] sm:$0xff] %v2485
          %2550 = vst [vmem:[#allocation2 + $0xc8] sm:$0xff] %v2486
          %2551 = vst [vmem:[#allocation2 + $0xd0] sm:$0xff] %v2487
          %2552 = vst [vmem:[#allocation2 + $0xd8] sm:$0xff] %v2488
          %2553 = vst [vmem:[#allocation2 + $0xe0] sm:$0xff] %v2489
          %2554 = vst [vmem:[#allocation2 + $0xe8] sm:$0xff] %v2490
          %2555 = vst [vmem:[#allocation2 + $0xf0] sm:$0xff] %v2491
          %2556 = vst [vmem:[#allocation2 + $0xf8] sm:$0xff] %v2492
          %2557 = vst [vmem:[#allocation2 + $0x100] sm:$0xff] %v2493
          %2558 = vst [vmem:[#allocation2 + $0x108] sm:$0xff] %v2494
          %2559 = vst [vmem:[#allocation2 + $0x110] sm:$0xff] %v2495
          %2560 = vst [vmem:[#allocation2 + $0x118] sm:$0xff] %v2496
          %2561 = vst [vmem:[#allocation2 + $0x120] sm:$0xff] %v2497
          %2562 = vst [vmem:[#allocation2 + $0x128] sm:$0xff] %v2498
          %2563 = vst [vmem:[#allocation2 + $0x130] sm:$0xff] %v2499
          %2564 = vst [vmem:[#allocation2 + $0x138] sm:$0xff] %v2500
          %2565 = vst [vmem:[#allocation2 + $0x140] sm:$0xff] %v2501
          %2566 = vst [vmem:[#allocation2 + $0x148] sm:$0xff] %v2502
          %2567 = vst [vmem:[#allocation2 + $0x150] sm:$0xff] %v2503
          %2568 = vst [vmem:[#allocation2 + $0x158] sm:$0xff] %v2504
          %2569 = vst [vmem:[#allocation2 + $0x160] sm:$0xff] %v2505
          %2570 = vst [vmem:[#allocation2 + $0x168] sm:$0xff] %v2506
          %2571 = vst [vmem:[#allocation2 + $0x170] sm:$0xff] %v2507
          %2572 = vst [vmem:[#allocation2 + $0x178] sm:$0xff] %v2508
          %2573 = vst [vmem:[#allocation2 + $0x180] sm:$0xff] %v2509
          %2574 = vst [vmem:[#allocation2 + $0x188] sm:$0xff] %v2510
          %2575 = vst [vmem:[#allocation2 + $0x190] sm:$0xff] %v2511
          %2576 = vst [vmem:[#allocation2 + $0x198] sm:$0xff] %v2512
          %2577 = vst [vmem:[#allocation2 + $0x1a0] sm:$0xff] %v2513
          %2578 = vst [vmem:[#allocation2 + $0x1a8] sm:$0xff] %v2514
          %2579 = vst [vmem:[#allocation2 + $0x1b0] sm:$0xff] %v2515
          %2580 = vst [vmem:[#allocation2 + $0x1b8] sm:$0xff] %v2516
          %2581 = vst [vmem:[#allocation2 + $0x1c0] sm:$0xff] %v2517
          %2582 = vst [vmem:[#allocation2 + $0x1c8] sm:$0xff] %v2518
          %2583 = vst [vmem:[#allocation2 + $0x1d0] sm:$0xff] %v2519
          %2584 = vst [vmem:[#allocation2 + $0x1d8] sm:$0xff] %v2520
          %2585 = vst [vmem:[#allocation2 + $0x1e0] sm:$0xff] %v2521
          %2586 = vst [vmem:[#allocation2 + $0x1e8] sm:$0xff] %v2522
          %2587 = vst [vmem:[#allocation2 + $0x1f0] sm:$0xff] %v2523
          %2588 = vst [vmem:[#allocation2 + $0x1f8] sm:$0xff] %v2524
        $region60: #{tpu_custom_call.1} parent=35 // pred_fallthru
          _
        %p2589 = scmp.eq.s32.totalorder %s38, 2
        // Predicated region
        $region61: #{tpu_custom_call.1} parent=35 // pred_check
          %p2590 = pneg %p2589
        $region62: #{tpu_custom_call.1} parent=35 // pred_check_branch
          %2592 = sbr.rel (%p2590) target = $region64
        $region63: #{tpu_custom_call.1} parent=35 // pred_region
          %v2593 = vld [vmem:[#allocation2] sm:$0xff]
          %v2594 = vld [vmem:[#allocation2 + $0x8] sm:$0xff]
          %v2595 = vld [vmem:[#allocation2 + $0x10] sm:$0xff]
          %v2596 = vld [vmem:[#allocation2 + $0x18] sm:$0xff]
          %v2597 = vld [vmem:[#allocation2 + $0x20] sm:$0xff]
          %v2598 = vld [vmem:[#allocation2 + $0x28] sm:$0xff]
          %v2599 = vld [vmem:[#allocation2 + $0x30] sm:$0xff]
          %v2600 = vld [vmem:[#allocation2 + $0x38] sm:$0xff]
          %v2601 = vld [vmem:[#allocation2 + $0x40] sm:$0xff]
          %v2602 = vld [vmem:[#allocation2 + $0x48] sm:$0xff]
          %v2603 = vld [vmem:[#allocation2 + $0x50] sm:$0xff]
          %v2604 = vld [vmem:[#allocation2 + $0x58] sm:$0xff]
          %v2605 = vld [vmem:[#allocation2 + $0x60] sm:$0xff]
          %v2606 = vld [vmem:[#allocation2 + $0x68] sm:$0xff]
          %v2607 = vld [vmem:[#allocation2 + $0x70] sm:$0xff]
          %v2608 = vld [vmem:[#allocation2 + $0x78] sm:$0xff]
          %v2609 = vld [vmem:[#allocation2 + $0x80] sm:$0xff]
          %v2610 = vld [vmem:[#allocation2 + $0x88] sm:$0xff]
          %v2611 = vld [vmem:[#allocation2 + $0x90] sm:$0xff]
          %v2612 = vld [vmem:[#allocation2 + $0x98] sm:$0xff]
          %v2613 = vld [vmem:[#allocation2 + $0xa0] sm:$0xff]
          %v2614 = vld [vmem:[#allocation2 + $0xa8] sm:$0xff]
          %v2615 = vld [vmem:[#allocation2 + $0xb0] sm:$0xff]
          %v2616 = vld [vmem:[#allocation2 + $0xb8] sm:$0xff]
          %v2617 = vld [vmem:[#allocation2 + $0xc0] sm:$0xff]
          %v2618 = vld [vmem:[#allocation2 + $0xc8] sm:$0xff]
          %v2619 = vld [vmem:[#allocation2 + $0xd0] sm:$0xff]
          %v2620 = vld [vmem:[#allocation2 + $0xd8] sm:$0xff]
          %v2621 = vld [vmem:[#allocation2 + $0xe0] sm:$0xff]
          %v2622 = vld [vmem:[#allocation2 + $0xe8] sm:$0xff]
          %v2623 = vld [vmem:[#allocation2 + $0xf0] sm:$0xff]
          %v2624 = vld [vmem:[#allocation2 + $0xf8] sm:$0xff]
          %v2625 = vld [vmem:[#allocation2 + $0x100] sm:$0xff]
          %v2626 = vld [vmem:[#allocation2 + $0x108] sm:$0xff]
          %v2627 = vld [vmem:[#allocation2 + $0x110] sm:$0xff]
          %v2628 = vld [vmem:[#allocation2 + $0x118] sm:$0xff]
          %v2629 = vld [vmem:[#allocation2 + $0x120] sm:$0xff]
          %v2630 = vld [vmem:[#allocation2 + $0x128] sm:$0xff]
          %v2631 = vld [vmem:[#allocation2 + $0x130] sm:$0xff]
          %v2632 = vld [vmem:[#allocation2 + $0x138] sm:$0xff]
          %v2633 = vld [vmem:[#allocation2 + $0x140] sm:$0xff]
          %v2634 = vld [vmem:[#allocation2 + $0x148] sm:$0xff]
          %v2635 = vld [vmem:[#allocation2 + $0x150] sm:$0xff]
          %v2636 = vld [vmem:[#allocation2 + $0x158] sm:$0xff]
          %v2637 = vld [vmem:[#allocation2 + $0x160] sm:$0xff]
          %v2638 = vld [vmem:[#allocation2 + $0x168] sm:$0xff]
          %v2639 = vld [vmem:[#allocation2 + $0x170] sm:$0xff]
          %v2640 = vld [vmem:[#allocation2 + $0x178] sm:$0xff]
          %v2641 = vld [vmem:[#allocation2 + $0x180] sm:$0xff]
          %v2642 = vld [vmem:[#allocation2 + $0x188] sm:$0xff]
          %v2643 = vld [vmem:[#allocation2 + $0x190] sm:$0xff]
          %v2644 = vld [vmem:[#allocation2 + $0x198] sm:$0xff]
          %v2645 = vld [vmem:[#allocation2 + $0x1a0] sm:$0xff]
          %v2646 = vld [vmem:[#allocation2 + $0x1a8] sm:$0xff]
          %v2647 = vld [vmem:[#allocation2 + $0x1b0] sm:$0xff]
          %v2648 = vld [vmem:[#allocation2 + $0x1b8] sm:$0xff]
          %v2649 = vld [vmem:[#allocation2 + $0x1c0] sm:$0xff]
          %v2650 = vld [vmem:[#allocation2 + $0x1c8] sm:$0xff]
          %v2651 = vld [vmem:[#allocation2 + $0x1d0] sm:$0xff]
          %v2652 = vld [vmem:[#allocation2 + $0x1d8] sm:$0xff]
          %v2653 = vld [vmem:[#allocation2 + $0x1e0] sm:$0xff]
          %v2654 = vld [vmem:[#allocation2 + $0x1e8] sm:$0xff]
          %v2655 = vld [vmem:[#allocation2 + $0x1f0] sm:$0xff]
          %v2656 = vld [vmem:[#allocation2 + $0x1f8] sm:$0xff]
          %v2657 = vld [vmem:[#allocation12] sm:$0x1]
          %v2659 = vlaneseq
          %v2660 = vshrl.u32 %v2659, 7
          %v2661 = vsub.s32 0, %v2660
          %v2662 = vrot.slane %v2657, %v2661
          %v2664 = vadd.f32 %v2593, %v2662
          %v2665 = vadd.f32 %v2594, %v2662
          %v2666 = vadd.f32 %v2595, %v2662
          %v2667 = vadd.f32 %v2596, %v2662
          %v2668 = vadd.f32 %v2597, %v2662
          %v2669 = vadd.f32 %v2598, %v2662
          %v2670 = vadd.f32 %v2599, %v2662
          %v2671 = vadd.f32 %v2600, %v2662
          %v2672 = vadd.f32 %v2601, %v2662
          %v2673 = vadd.f32 %v2602, %v2662
          %v2674 = vadd.f32 %v2603, %v2662
          %v2675 = vadd.f32 %v2604, %v2662
          %v2676 = vadd.f32 %v2605, %v2662
          %v2677 = vadd.f32 %v2606, %v2662
          %v2678 = vadd.f32 %v2607, %v2662
          %v2679 = vadd.f32 %v2608, %v2662
          %v2680 = vadd.f32 %v2609, %v2662
          %v2681 = vadd.f32 %v2610, %v2662
          %v2682 = vadd.f32 %v2611, %v2662
          %v2683 = vadd.f32 %v2612, %v2662
          %v2684 = vadd.f32 %v2613, %v2662
          %v2685 = vadd.f32 %v2614, %v2662
          %v2686 = vadd.f32 %v2615, %v2662
          %v2687 = vadd.f32 %v2616, %v2662
          %v2688 = vadd.f32 %v2617, %v2662
          %v2689 = vadd.f32 %v2618, %v2662
          %v2690 = vadd.f32 %v2619, %v2662
          %v2691 = vadd.f32 %v2620, %v2662
          %v2692 = vadd.f32 %v2621, %v2662
          %v2693 = vadd.f32 %v2622, %v2662
          %v2694 = vadd.f32 %v2623, %v2662
          %v2695 = vadd.f32 %v2624, %v2662
          %v2696 = vadd.f32 %v2625, %v2662
          %v2697 = vadd.f32 %v2626, %v2662
          %v2698 = vadd.f32 %v2627, %v2662
          %v2699 = vadd.f32 %v2628, %v2662
          %v2700 = vadd.f32 %v2629, %v2662
          %v2701 = vadd.f32 %v2630, %v2662
          %v2702 = vadd.f32 %v2631, %v2662
          %v2703 = vadd.f32 %v2632, %v2662
          %v2704 = vadd.f32 %v2633, %v2662
          %v2705 = vadd.f32 %v2634, %v2662
          %v2706 = vadd.f32 %v2635, %v2662
          %v2707 = vadd.f32 %v2636, %v2662
          %v2708 = vadd.f32 %v2637, %v2662
          %v2709 = vadd.f32 %v2638, %v2662
          %v2710 = vadd.f32 %v2639, %v2662
          %v2711 = vadd.f32 %v2640, %v2662
          %v2712 = vadd.f32 %v2641, %v2662
          %v2713 = vadd.f32 %v2642, %v2662
          %v2714 = vadd.f32 %v2643, %v2662
          %v2715 = vadd.f32 %v2644, %v2662
          %v2716 = vadd.f32 %v2645, %v2662
          %v2717 = vadd.f32 %v2646, %v2662
          %v2718 = vadd.f32 %v2647, %v2662
          %v2719 = vadd.f32 %v2648, %v2662
          %v2720 = vadd.f32 %v2649, %v2662
          %v2721 = vadd.f32 %v2650, %v2662
          %v2722 = vadd.f32 %v2651, %v2662
          %v2723 = vadd.f32 %v2652, %v2662
          %v2724 = vadd.f32 %v2653, %v2662
          %v2725 = vadd.f32 %v2654, %v2662
          %v2726 = vadd.f32 %v2655, %v2662
          %v2727 = vadd.f32 %v2656, %v2662
          %2728 = vst [vmem:[%s325] sm:$0xff] %v2664
          %2729 = vst [vmem:[%s325 + $0x8] sm:$0xff] %v2665
          %2730 = vst [vmem:[%s325 + $0x10] sm:$0xff] %v2666
          %2731 = vst [vmem:[%s325 + $0x18] sm:$0xff] %v2667
          %2732 = vst [vmem:[%s325 + $0x20] sm:$0xff] %v2668
          %2733 = vst [vmem:[%s325 + $0x28] sm:$0xff] %v2669
          %2734 = vst [vmem:[%s325 + $0x30] sm:$0xff] %v2670
          %2735 = vst [vmem:[%s325 + $0x38] sm:$0xff] %v2671
          %2736 = vst [vmem:[%s325 + $0x40] sm:$0xff] %v2672
          %2737 = vst [vmem:[%s325 + $0x48] sm:$0xff] %v2673
          %2738 = vst [vmem:[%s325 + $0x50] sm:$0xff] %v2674
          %2739 = vst [vmem:[%s325 + $0x58] sm:$0xff] %v2675
          %2740 = vst [vmem:[%s325 + $0x60] sm:$0xff] %v2676
          %2741 = vst [vmem:[%s325 + $0x68] sm:$0xff] %v2677
          %2742 = vst [vmem:[%s325 + $0x70] sm:$0xff] %v2678
          %2743 = vst [vmem:[%s325 + $0x78] sm:$0xff] %v2679
          %2744 = vst [vmem:[%s325 + $0x80] sm:$0xff] %v2680
          %2745 = vst [vmem:[%s325 + $0x88] sm:$0xff] %v2681
          %2746 = vst [vmem:[%s325 + $0x90] sm:$0xff] %v2682
          %2747 = vst [vmem:[%s325 + $0x98] sm:$0xff] %v2683
          %2748 = vst [vmem:[%s325 + $0xa0] sm:$0xff] %v2684
          %2749 = vst [vmem:[%s325 + $0xa8] sm:$0xff] %v2685
          %2750 = vst [vmem:[%s325 + $0xb0] sm:$0xff] %v2686
          %2751 = vst [vmem:[%s325 + $0xb8] sm:$0xff] %v2687
          %2752 = vst [vmem:[%s325 + $0xc0] sm:$0xff] %v2688
          %2753 = vst [vmem:[%s325 + $0xc8] sm:$0xff] %v2689
          %2754 = vst [vmem:[%s325 + $0xd0] sm:$0xff] %v2690
          %2755 = vst [vmem:[%s325 + $0xd8] sm:$0xff] %v2691
          %2756 = vst [vmem:[%s325 + $0xe0] sm:$0xff] %v2692
          %2757 = vst [vmem:[%s325 + $0xe8] sm:$0xff] %v2693
          %2758 = vst [vmem:[%s325 + $0xf0] sm:$0xff] %v2694
          %2759 = vst [vmem:[%s325 + $0xf8] sm:$0xff] %v2695
          %2760 = vst [vmem:[%s325 + $0x100] sm:$0xff] %v2696
          %2761 = vst [vmem:[%s325 + $0x108] sm:$0xff] %v2697
          %2762 = vst [vmem:[%s325 + $0x110] sm:$0xff] %v2698
          %2763 = vst [vmem:[%s325 + $0x118] sm:$0xff] %v2699
          %2764 = vst [vmem:[%s325 + $0x120] sm:$0xff] %v2700
          %2765 = vst [vmem:[%s325 + $0x128] sm:$0xff] %v2701
          %2766 = vst [vmem:[%s325 + $0x130] sm:$0xff] %v2702
          %2767 = vst [vmem:[%s325 + $0x138] sm:$0xff] %v2703
          %2768 = vst [vmem:[%s325 + $0x140] sm:$0xff] %v2704
          %2769 = vst [vmem:[%s325 + $0x148] sm:$0xff] %v2705
          %2770 = vst [vmem:[%s325 + $0x150] sm:$0xff] %v2706
          %2771 = vst [vmem:[%s325 + $0x158] sm:$0xff] %v2707
          %2772 = vst [vmem:[%s325 + $0x160] sm:$0xff] %v2708
          %2773 = vst [vmem:[%s325 + $0x168] sm:$0xff] %v2709
          %2774 = vst [vmem:[%s325 + $0x170] sm:$0xff] %v2710
          %2775 = vst [vmem:[%s325 + $0x178] sm:$0xff] %v2711
          %2776 = vst [vmem:[%s325 + $0x180] sm:$0xff] %v2712
          %2777 = vst [vmem:[%s325 + $0x188] sm:$0xff] %v2713
          %2778 = vst [vmem:[%s325 + $0x190] sm:$0xff] %v2714
          %2779 = vst [vmem:[%s325 + $0x198] sm:$0xff] %v2715
          %2780 = vst [vmem:[%s325 + $0x1a0] sm:$0xff] %v2716
          %2781 = vst [vmem:[%s325 + $0x1a8] sm:$0xff] %v2717
          %2782 = vst [vmem:[%s325 + $0x1b0] sm:$0xff] %v2718
          %2783 = vst [vmem:[%s325 + $0x1b8] sm:$0xff] %v2719
          %2784 = vst [vmem:[%s325 + $0x1c0] sm:$0xff] %v2720
          %2785 = vst [vmem:[%s325 + $0x1c8] sm:$0xff] %v2721
          %2786 = vst [vmem:[%s325 + $0x1d0] sm:$0xff] %v2722
          %2787 = vst [vmem:[%s325 + $0x1d8] sm:$0xff] %v2723
          %2788 = vst [vmem:[%s325 + $0x1e0] sm:$0xff] %v2724
          %2789 = vst [vmem:[%s325 + $0x1e8] sm:$0xff] %v2725
          %2790 = vst [vmem:[%s325 + $0x1f0] sm:$0xff] %v2726
          %2791 = vst [vmem:[%s325 + $0x1f8] sm:$0xff] %v2727
        $region64: #{tpu_custom_call.1} parent=35 // pred_fallthru
          _
        %s2792 = sand.u32 %s161, 1
        %s2793 = scalar_lea.sflag [#allocation8], %s2792
        %s2794 = sand.u32 %s161, 1
        %s2795 = smul.addr %s2794, 512
        %s2796 = scalar_lea.vmem [#allocation14], %s2795
        // Predicated region
        $region65: #{tpu_custom_call.1} parent=35 // pred_check
          %p2797 = pneg %p171
        $region66: #{tpu_custom_call.1} parent=35 // pred_check_branch
          %2799 = sbr.rel (%p2797) target = $region68
        $region67: #{tpu_custom_call.1} parent=35 // pred_region
          %s2800 = smul.u32 64, %s37
          %s2802 = ssub.s32 8192, 8192
          %2803 = vsyncadd %s2793, %s2802
          %s2804 = smul.addr %s2800, 128
          %s2805 = scalar_lea.hbm %s6, %s2804
          %s2806 = sshll.u32 %s2796, 4
          %s2807 = int_to_ptr.vmem [resolvable:$true] %s2806
          %2812 = dma.vmem_to_hbm [thread:$0]  %s2807, 8192, %s2805, %s2793, 128, 128, 8
        $region68: #{tpu_custom_call.1} parent=35 // pred_fallthru
          _
      $region36: #{tpu_custom_call.1} parent=5 // pred_fallthru
        _
      %p2813 = scmp.le.s32.totalorder 2, %s28
      // Predicated region
      $region69: #{tpu_custom_call.1} parent=5 // pred_check
        %p2814 = pneg %p2813
      $region70: #{tpu_custom_call.1} parent=5 // pred_check_branch
        %2816 = sbr.rel (%p2814) target = $region72
      $region71: #{tpu_custom_call.1} parent=5 // pred_region
        %s2817 = ssub.s32 %s28, 2
        // Predicated region
        $region73: #{tpu_custom_call.1} parent=71 // pred_check
          %p2818 = pneg %p177
        $region74: #{tpu_custom_call.1} parent=71 // pred_check_branch
          %2820 = sbr.rel (%p2818) target = $region76
        $region75: #{tpu_custom_call.1} parent=71 // pred_region
          %s2821 = sand.u32 %s162, 1
          %s2822 = scalar_lea.sflag [#allocation8], %s2821
          %s2823 = sand.u32 %s162, 1
          %s2824 = smul.addr %s2823, 512
          %s2825 = scalar_lea.vmem [#allocation14], %s2824
          %2826 = dma.done %s2822, 8192
        $region76: #{tpu_custom_call.1} parent=71 // pred_fallthru
          _
      $region72: #{tpu_custom_call.1} parent=5 // pred_fallthru
        _
    $region6: #{tpu_custom_call.1} parent=1 // loop_footer
      %s32 = sadd.s32 1, %s28
    $region7: #{tpu_custom_call.1} parent=1 // loop_footer_branch
      %27 = sbr.rel target = $region3
    $region8: #{tpu_custom_call.1} parent=1 // loop_exit
      _
    %2827 = vsyncpa [#allocation7], 1
    %s2828 = scalar_lea.sflag [#allocation7], 1
    %2829 = vsyncpa %s2828, 1
    %2830 = vsyncpa [#allocation10], 1
    %s2831 = scalar_lea.sflag [#allocation10], 1
    %2832 = vsyncpa %s2831, 1
    %2833 = vsyncpa [#allocation13], 1
    %2834 = vsyncpa [#allocation8], 1
    %s2835 = scalar_lea.sflag [#allocation8], 1
    %2836 = vsyncpa %s2835, 1

</llo_original>
